<compile_context>
chip_gen: v6e
topology: v6e:2x2x1
jax: 0.10.0
libtpu: 0.0.40
codegen_flags: <defaults>
</compile_context>

<pallas_src>
import jax
import jax.numpy as jnp
from jax import lax
from jax.experimental import pallas as pl
from jax.experimental.pallas import tpu as pltpu

KH, KW = 3, 3  # kernel size (padding=1 -> "same" output)


def _conv3x3_kernel(w_ref, b_ref, x_ref, o_ref, shift_ref):
    """One batch element of a 3x3 'same' convolution, NCHW, VPU formulation.

    w_ref:     (Cout*Cin*9,) f32 SMEM     -- PyTorch OIHW weights, flattened
    b_ref:     (Cout,)       f32 SMEM
    x_ref:     (1, Cin, H, W)      VMEM   -- unpadded input block
    o_ref:     (1, Cout, H, W)     VMEM
    shift_ref: (Cin, 3, H+2, W) f32 VMEM  -- shift_ref[ci, kw, r, w] == Ppad[r, w+kw]
               where Ppad is the zero-padded (H+2, W+2) plane of channel ci.
    """
    Cout = o_ref.shape[1]
    H, W = o_ref.shape[2], o_ref.shape[3]
    Cin = x_ref.shape[1]
    Hp = H + 2
    f32 = jnp.float32

    # Row-block height: 3 accumulators + 1 tap + construction temps stay well
    # under the 64-vreg file (e.g. H=256, W=192 -> ~20 live vregs per block).
    TH = H if H <= 16 else 16
    if W > 512:
        TH = min(TH, 8)
    nb = H // TH
    rem = H - nb * TH

    # ---- hoisted SMEM scalar reads (loop-invariant weights / bias) --------
    wv = [[[[w_ref[((co * Cin + ci) * KH + kh) * KW + kw]
             for kw in range(KW)]
            for kh in range(KH)]
           for ci in range(Cin)]
          for co in range(Cout)]
    bv = [b_ref[co] for co in range(Cout)]

    # ---- zero the top/bottom halo rows of the shifted planes --------------
    # Edge columns are written as part of every construction block, so only
    # the two halo rows need zeroing.  Re-done every grid step so the kernel
    # is safe under megacore sharding of the batch axis.
    zrow = jnp.zeros((1, W), f32)
    for ci in range(Cin):
        for kw in range(KW):
            shift_ref[ci, kw, 0:1, :] = zrow
            shift_ref[ci, kw, Hp - 1:Hp, :] = zrow

    # ---- phase 1: build the 3 column-shifted planes per channel -----------
    # (kw shift hoisting: 3 shift constructions per channel instead of 9
    #  doubly-shifted tap slices; the FMA loop below only does lane-aligned
    #  row-slice loads.)
    def build_block(r0, bh):
        for ci in range(Cin):
            xc = x_ref[0, ci, pl.ds(r0, bh), :].astype(f32)      # (bh, W)
            zc = jnp.zeros((bh, 1), f32)
            if W > 1:
                left = jnp.concatenate([zc, xc[:, :W - 1]], axis=1)
                right = jnp.concatenate([xc[:, 1:], zc], axis=1)
            else:
                left = zc
                right = zc
            shift_ref[ci, 0, pl.ds(r0 + 1, bh), :] = left        # Ppad[., w+0]
            shift_ref[ci, 1, pl.ds(r0 + 1, bh), :] = xc          # Ppad[., w+1]
            shift_ref[ci, 2, pl.ds(r0 + 1, bh), :] = right       # Ppad[., w+2]

    # ---- phase 2: row-blocked accumulation ---------------------------------
    def compute_block(r0, bh):
        accs = [jnp.full((bh, W), bv[co], dtype=f32) for co in range(Cout)]
        for ci in range(Cin):
            for kw in range(KW):
                for kh in range(KH):
                    tap = shift_ref[ci, kw, pl.ds(r0 + kh, bh), :]   # (bh, W)
                    for co in range(Cout):
                        accs[co] = accs[co] + wv[co][ci][kh][kw] * tap
        for co in range(Cout):
            o_ref[0, co, pl.ds(r0, bh), :] = accs[co].astype(o_ref.dtype)

    def over_blocks(fn):
        if nb == 1:
            fn(0, TH)
        else:
            def body(i, carry):
                r0 = pl.multiple_of(i * TH, TH)
                fn(r0, TH)
                return carry
            lax.fori_loop(0, nb, body, 0)
        if rem:
            fn(nb * TH, rem)

    over_blocks(build_block)     # all shifted planes ready ...
    over_blocks(compute_block)   # ... before any taps are consumed


def gmm_forward(person, cloth, weight, bias):
    """GMM.forward: returns (warped_cloth, flow=None).

    person, cloth: (N, 3, H, W) float32, NCHW (PyTorch convention)
    weight:        (3, 3, 3, 3) float32, PyTorch (Cout, Cin, kh, kw)
    bias:          (3,)         float32
    """
    del person  # unused by the reference forward pass

    N, Cin, H, W = cloth.shape
    Cout = weight.shape[0]
    Hp = H + 2

    w_flat = weight.reshape(-1).astype(jnp.float32)   # OIHW, row-major flat
    b = bias.astype(jnp.float32)

    # Scoped-VMEM budget: double-buffered in/out blocks + shifted-plane
    # scratch, padded to the (8, 128) tiles the compiler actually allocates.
    def _rup(v, m):
        return ((v + m - 1) // m) * m

    blk_in = Cin * _rup(H, 8) * _rup(W, 128) * 4
    blk_out = Cout * _rup(H, 8) * _rup(W, 128) * 4
    scr = Cin * KW * _rup(Hp, 8) * _rup(W, 128) * 4
    vmem_limit = int(min(max(2 * (blk_in + blk_out) + scr + (2 << 20), 16 << 20),
                         64 << 20))

    warped_cloth = pl.pallas_call(
        _conv3x3_kernel,
        out_shape=jax.ShapeDtypeStruct((N, Cout, H, W), cloth.dtype),
        grid_spec=pltpu.PrefetchScalarGridSpec(
            num_scalar_prefetch=0,
            grid=(N,),
            in_specs=[
                pl.BlockSpec(memory_space=pltpu.MemorySpace.SMEM),       # weights
                pl.BlockSpec(memory_space=pltpu.MemorySpace.SMEM),       # bias
                pl.BlockSpec((1, Cin, H, W), lambda n: (n, 0, 0, 0)),    # image
            ],
            out_specs=pl.BlockSpec((1, Cout, H, W), lambda n: (n, 0, 0, 0)),
            scratch_shapes=[pltpu.VMEM((Cin, KW, Hp, W), jnp.float32)],
        ),
        compiler_params=pltpu.CompilerParams(
            dimension_semantics=("parallel",),
            vmem_limit_bytes=vmem_limit,
        ),
    )(w_flat, b, cloth)

    flow = None
    return warped_cloth, flow


if __name__ == "__main__":
    key = jax.random.PRNGKey(0)
    k_person, k_cloth, k_w, k_b = jax.random.split(key, 4)

    N, C, H, W = 2, 3, 16, 16
    person = jax.random.normal(k_person, (N, C, H, W), dtype=jnp.float32)
    cloth = jax.random.normal(k_cloth, (N, C, H, W), dtype=jnp.float32)

    # Deterministic synthetic parameters for Conv2d(3, 3, kernel_size=3, padding=1):
    fan_in = C * KH * KW
    bound = 1.0 / (fan_in ** 0.5)
    weight = jax.random.uniform(k_w, (3, 3, KH, KW), dtype=jnp.float32,
                                minval=-bound, maxval=bound)
    bias = jax.random.uniform(k_b, (3,), dtype=jnp.float32,
                              minval=-bound, maxval=bound)

    warped_cloth, flow = gmm_forward(person, cloth, weight, bias)
    warped_cloth = jax.block_until_ready(warped_cloth)

    # Sanity check against a plain-JAX reference conv.
    ref = lax.conv_general_dilated(
        cloth, weight, window_strides=(1, 1), padding="SAME",
        dimension_numbers=("NCHW", "OIHW", "NCHW"),
    ) + bias.reshape(1, 3, 1, 1)

    assert warped_cloth.shape == (N, 3, H, W)
    assert flow is None
    assert jnp.allclose(warped_cloth, ref, atol=1e-5, rtol=1e-5), float(
        jnp.max(jnp.abs(warped_cloth - ref)))

    print("KERNEL_OK")
</pallas_src>

<mosaic_0001>
module attributes {stable_mosaic.version = 11 : i64} {
  func.func @_conv3x3_kernel(%arg0: i32, %arg1: memref<81xf32, #tpu.memory_space<smem>>, %arg2: memref<3xf32, #tpu.memory_space<smem>>, %arg3: memref<1x3x16x16xf32, #tpu.memory_space<vmem>>, %arg4: memref<1x3x16x16xf32, #tpu.memory_space<vmem>>, %arg5: memref<3x3x18x16xf32, #tpu.memory_space<vmem>>) attributes {dimension_semantics = [#tpu.dimension_semantics<parallel>], iteration_bounds = array<i64: 2>, scalar_prefetch = 0 : i64, scratch_operands = 1 : i64, tpu.core_type = #tpu.core_type<tc>, window_params = [{transform_indices = @transform_0, window_bounds = array<i64: 81>}, {transform_indices = @transform_1, window_bounds = array<i64: 3>}, {transform_indices = @transform_2, window_bounds = array<i64: 1, 3, 16, 16>}, {transform_indices = @transform_3, window_bounds = array<i64: 1, 3, 16, 16>}]} {
    %c0 = arith.constant 0 : index
    %0 = memref.load %arg1[%c0] : memref<81xf32, #tpu.memory_space<smem>>
    %c1 = arith.constant 1 : index
    %1 = memref.load %arg1[%c1] : memref<81xf32, #tpu.memory_space<smem>>
    %c2 = arith.constant 2 : index
    %2 = memref.load %arg1[%c2] : memref<81xf32, #tpu.memory_space<smem>>
    %c3 = arith.constant 3 : index
    %3 = memref.load %arg1[%c3] : memref<81xf32, #tpu.memory_space<smem>>
    %c4 = arith.constant 4 : index
    %4 = memref.load %arg1[%c4] : memref<81xf32, #tpu.memory_space<smem>>
    %c5 = arith.constant 5 : index
    %5 = memref.load %arg1[%c5] : memref<81xf32, #tpu.memory_space<smem>>
    %c6 = arith.constant 6 : index
    %6 = memref.load %arg1[%c6] : memref<81xf32, #tpu.memory_space<smem>>
    %c7 = arith.constant 7 : index
    %7 = memref.load %arg1[%c7] : memref<81xf32, #tpu.memory_space<smem>>
    %c8 = arith.constant 8 : index
    %8 = memref.load %arg1[%c8] : memref<81xf32, #tpu.memory_space<smem>>
    %c9 = arith.constant 9 : index
    %9 = memref.load %arg1[%c9] : memref<81xf32, #tpu.memory_space<smem>>
    %c10 = arith.constant 10 : index
    %10 = memref.load %arg1[%c10] : memref<81xf32, #tpu.memory_space<smem>>
    %c11 = arith.constant 11 : index
    %11 = memref.load %arg1[%c11] : memref<81xf32, #tpu.memory_space<smem>>
    %c12 = arith.constant 12 : index
    %12 = memref.load %arg1[%c12] : memref<81xf32, #tpu.memory_space<smem>>
    %c13 = arith.constant 13 : index
    %13 = memref.load %arg1[%c13] : memref<81xf32, #tpu.memory_space<smem>>
    %c14 = arith.constant 14 : index
    %14 = memref.load %arg1[%c14] : memref<81xf32, #tpu.memory_space<smem>>
    %c15 = arith.constant 15 : index
    %15 = memref.load %arg1[%c15] : memref<81xf32, #tpu.memory_space<smem>>
    %c16 = arith.constant 16 : index
    %16 = memref.load %arg1[%c16] : memref<81xf32, #tpu.memory_space<smem>>
    %c17 = arith.constant 17 : index
    %17 = memref.load %arg1[%c17] : memref<81xf32, #tpu.memory_space<smem>>
    %c18 = arith.constant 18 : index
    %18 = memref.load %arg1[%c18] : memref<81xf32, #tpu.memory_space<smem>>
    %c19 = arith.constant 19 : index
    %19 = memref.load %arg1[%c19] : memref<81xf32, #tpu.memory_space<smem>>
    %c20 = arith.constant 20 : index
    %20 = memref.load %arg1[%c20] : memref<81xf32, #tpu.memory_space<smem>>
    %c21 = arith.constant 21 : index
    %21 = memref.load %arg1[%c21] : memref<81xf32, #tpu.memory_space<smem>>
    %c22 = arith.constant 22 : index
    %22 = memref.load %arg1[%c22] : memref<81xf32, #tpu.memory_space<smem>>
    %c23 = arith.constant 23 : index
    %23 = memref.load %arg1[%c23] : memref<81xf32, #tpu.memory_space<smem>>
    %c24 = arith.constant 24 : index
    %24 = memref.load %arg1[%c24] : memref<81xf32, #tpu.memory_space<smem>>
    %c25 = arith.constant 25 : index
    %25 = memref.load %arg1[%c25] : memref<81xf32, #tpu.memory_space<smem>>
    %c26 = arith.constant 26 : index
    %26 = memref.load %arg1[%c26] : memref<81xf32, #tpu.memory_space<smem>>
    %c27 = arith.constant 27 : index
    %27 = memref.load %arg1[%c27] : memref<81xf32, #tpu.memory_space<smem>>
    %c28 = arith.constant 28 : index
    %28 = memref.load %arg1[%c28] : memref<81xf32, #tpu.memory_space<smem>>
    %c29 = arith.constant 29 : index
    %29 = memref.load %arg1[%c29] : memref<81xf32, #tpu.memory_space<smem>>
    %c30 = arith.constant 30 : index
    %30 = memref.load %arg1[%c30] : memref<81xf32, #tpu.memory_space<smem>>
    %c31 = arith.constant 31 : index
    %31 = memref.load %arg1[%c31] : memref<81xf32, #tpu.memory_space<smem>>
    %c32 = arith.constant 32 : index
    %32 = memref.load %arg1[%c32] : memref<81xf32, #tpu.memory_space<smem>>
    %c33 = arith.constant 33 : index
    %33 = memref.load %arg1[%c33] : memref<81xf32, #tpu.memory_space<smem>>
    %c34 = arith.constant 34 : index
    %34 = memref.load %arg1[%c34] : memref<81xf32, #tpu.memory_space<smem>>
    %c35 = arith.constant 35 : index
    %35 = memref.load %arg1[%c35] : memref<81xf32, #tpu.memory_space<smem>>
    %c36 = arith.constant 36 : index
    %36 = memref.load %arg1[%c36] : memref<81xf32, #tpu.memory_space<smem>>
    %c37 = arith.constant 37 : index
    %37 = memref.load %arg1[%c37] : memref<81xf32, #tpu.memory_space<smem>>
    %c38 = arith.constant 38 : index
    %38 = memref.load %arg1[%c38] : memref<81xf32, #tpu.memory_space<smem>>
    %c39 = arith.constant 39 : index
    %39 = memref.load %arg1[%c39] : memref<81xf32, #tpu.memory_space<smem>>
    %c40 = arith.constant 40 : index
    %40 = memref.load %arg1[%c40] : memref<81xf32, #tpu.memory_space<smem>>
    %c41 = arith.constant 41 : index
    %41 = memref.load %arg1[%c41] : memref<81xf32, #tpu.memory_space<smem>>
    %c42 = arith.constant 42 : index
    %42 = memref.load %arg1[%c42] : memref<81xf32, #tpu.memory_space<smem>>
    %c43 = arith.constant 43 : index
    %43 = memref.load %arg1[%c43] : memref<81xf32, #tpu.memory_space<smem>>
    %c44 = arith.constant 44 : index
    %44 = memref.load %arg1[%c44] : memref<81xf32, #tpu.memory_space<smem>>
    %c45 = arith.constant 45 : index
    %45 = memref.load %arg1[%c45] : memref<81xf32, #tpu.memory_space<smem>>
    %c46 = arith.constant 46 : index
    %46 = memref.load %arg1[%c46] : memref<81xf32, #tpu.memory_space<smem>>
    %c47 = arith.constant 47 : index
    %47 = memref.load %arg1[%c47] : memref<81xf32, #tpu.memory_space<smem>>
    %c48 = arith.constant 48 : index
    %48 = memref.load %arg1[%c48] : memref<81xf32, #tpu.memory_space<smem>>
    %c49 = arith.constant 49 : index
    %49 = memref.load %arg1[%c49] : memref<81xf32, #tpu.memory_space<smem>>
    %c50 = arith.constant 50 : index
    %50 = memref.load %arg1[%c50] : memref<81xf32, #tpu.memory_space<smem>>
    %c51 = arith.constant 51 : index
    %51 = memref.load %arg1[%c51] : memref<81xf32, #tpu.memory_space<smem>>
    %c52 = arith.constant 52 : index
    %52 = memref.load %arg1[%c52] : memref<81xf32, #tpu.memory_space<smem>>
    %c53 = arith.constant 53 : index
    %53 = memref.load %arg1[%c53] : memref<81xf32, #tpu.memory_space<smem>>
    %c54 = arith.constant 54 : index
    %54 = memref.load %arg1[%c54] : memref<81xf32, #tpu.memory_space<smem>>
    %c55 = arith.constant 55 : index
    %55 = memref.load %arg1[%c55] : memref<81xf32, #tpu.memory_space<smem>>
    %c56 = arith.constant 56 : index
    %56 = memref.load %arg1[%c56] : memref<81xf32, #tpu.memory_space<smem>>
    %c57 = arith.constant 57 : index
    %57 = memref.load %arg1[%c57] : memref<81xf32, #tpu.memory_space<smem>>
    %c58 = arith.constant 58 : index
    %58 = memref.load %arg1[%c58] : memref<81xf32, #tpu.memory_space<smem>>
    %c59 = arith.constant 59 : index
    %59 = memref.load %arg1[%c59] : memref<81xf32, #tpu.memory_space<smem>>
    %c60 = arith.constant 60 : index
    %60 = memref.load %arg1[%c60] : memref<81xf32, #tpu.memory_space<smem>>
    %c61 = arith.constant 61 : index
    %61 = memref.load %arg1[%c61] : memref<81xf32, #tpu.memory_space<smem>>
    %c62 = arith.constant 62 : index
    %62 = memref.load %arg1[%c62] : memref<81xf32, #tpu.memory_space<smem>>
    %c63 = arith.constant 63 : index
    %63 = memref.load %arg1[%c63] : memref<81xf32, #tpu.memory_space<smem>>
    %c64 = arith.constant 64 : index
    %64 = memref.load %arg1[%c64] : memref<81xf32, #tpu.memory_space<smem>>
    %c65 = arith.constant 65 : index
    %65 = memref.load %arg1[%c65] : memref<81xf32, #tpu.memory_space<smem>>
    %c66 = arith.constant 66 : index
    %66 = memref.load %arg1[%c66] : memref<81xf32, #tpu.memory_space<smem>>
    %c67 = arith.constant 67 : index
    %67 = memref.load %arg1[%c67] : memref<81xf32, #tpu.memory_space<smem>>
    %c68 = arith.constant 68 : index
    %68 = memref.load %arg1[%c68] : memref<81xf32, #tpu.memory_space<smem>>
    %c69 = arith.constant 69 : index
    %69 = memref.load %arg1[%c69] : memref<81xf32, #tpu.memory_space<smem>>
    %c70 = arith.constant 70 : index
    %70 = memref.load %arg1[%c70] : memref<81xf32, #tpu.memory_space<smem>>
    %c71 = arith.constant 71 : index
    %71 = memref.load %arg1[%c71] : memref<81xf32, #tpu.memory_space<smem>>
    %c72 = arith.constant 72 : index
    %72 = memref.load %arg1[%c72] : memref<81xf32, #tpu.memory_space<smem>>
    %c73 = arith.constant 73 : index
    %73 = memref.load %arg1[%c73] : memref<81xf32, #tpu.memory_space<smem>>
    %c74 = arith.constant 74 : index
    %74 = memref.load %arg1[%c74] : memref<81xf32, #tpu.memory_space<smem>>
    %c75 = arith.constant 75 : index
    %75 = memref.load %arg1[%c75] : memref<81xf32, #tpu.memory_space<smem>>
    %c76 = arith.constant 76 : index
    %76 = memref.load %arg1[%c76] : memref<81xf32, #tpu.memory_space<smem>>
    %c77 = arith.constant 77 : index
    %77 = memref.load %arg1[%c77] : memref<81xf32, #tpu.memory_space<smem>>
    %c78 = arith.constant 78 : index
    %78 = memref.load %arg1[%c78] : memref<81xf32, #tpu.memory_space<smem>>
    %c79 = arith.constant 79 : index
    %79 = memref.load %arg1[%c79] : memref<81xf32, #tpu.memory_space<smem>>
    %c80 = arith.constant 80 : index
    %80 = memref.load %arg1[%c80] : memref<81xf32, #tpu.memory_space<smem>>
    %c0_0 = arith.constant 0 : index
    %81 = memref.load %arg2[%c0_0] : memref<3xf32, #tpu.memory_space<smem>>
    %c1_1 = arith.constant 1 : index
    %82 = memref.load %arg2[%c1_1] : memref<3xf32, #tpu.memory_space<smem>>
    %c2_2 = arith.constant 2 : index
    %83 = memref.load %arg2[%c2_2] : memref<3xf32, #tpu.memory_space<smem>>
    %cst = arith.constant 0.000000e+00 : f32
    %84 = vector.broadcast %cst : f32 to vector<1x16xf32>
    %c0_3 = arith.constant 0 : index
    %c0_4 = arith.constant 0 : index
    %c0_5 = arith.constant 0 : index
    %c0_6 = arith.constant 0 : index
    %85 = vector.load %arg5[%c0_3, %c0_4, %c0_5, %c0_6] : memref<3x3x18x16xf32, #tpu.memory_space<vmem>>, vector<1x1x1x16xf32>
    %86 = vector.shape_cast %85 : vector<1x1x1x16xf32> to vector<1x16xf32>
    %87 = vector.shape_cast %84 : vector<1x16xf32> to vector<1x1x1x16xf32>
    tpu.vector_store %arg5[%c0_3, %c0_4, %c0_5, %c0_6], %87 {strides = array<i32>} : memref<3x3x18x16xf32, #tpu.memory_space<vmem>>, vector<1x1x1x16xf32>,
    %c0_7 = arith.constant 0 : index
    %c0_8 = arith.constant 0 : index
    %c17_9 = arith.constant 17 : index
    %c0_10 = arith.constant 0 : index
    %88 = vector.load %arg5[%c0_7, %c0_8, %c17_9, %c0_10] : memref<3x3x18x16xf32, #tpu.memory_space<vmem>>, vector<1x1x1x16xf32>
    %89 = vector.shape_cast %88 : vector<1x1x1x16xf32> to vector<1x16xf32>
    %90 = vector.shape_cast %84 : vector<1x16xf32> to vector<1x1x1x16xf32>
    tpu.vector_store %arg5[%c0_7, %c0_8, %c17_9, %c0_10], %90 {strides = array<i32>} : memref<3x3x18x16xf32, #tpu.memory_space<vmem>>, vector<1x1x1x16xf32>,
    %c0_11 = arith.constant 0 : index
    %c1_12 = arith.constant 1 : index
    %c0_13 = arith.constant 0 : index
    %c0_14 = arith.constant 0 : index
    %91 = vector.load %arg5[%c0_11, %c1_12, %c0_13, %c0_14] : memref<3x3x18x16xf32, #tpu.memory_space<vmem>>, vector<1x1x1x16xf32>
    %92 = vector.shape_cast %91 : vector<1x1x1x16xf32> to vector<1x16xf32>
    %93 = vector.shape_cast %84 : vector<1x16xf32> to vector<1x1x1x16xf32>
    tpu.vector_store %arg5[%c0_11, %c1_12, %c0_13, %c0_14], %93 {strides = array<i32>} : memref<3x3x18x16xf32, #tpu.memory_space<vmem>>, vector<1x1x1x16xf32>,
    %c0_15 = arith.constant 0 : index
    %c1_16 = arith.constant 1 : index
    %c17_17 = arith.constant 17 : index
    %c0_18 = arith.constant 0 : index
    %94 = vector.load %arg5[%c0_15, %c1_16, %c17_17, %c0_18] : memref<3x3x18x16xf32, #tpu.memory_space<vmem>>, vector<1x1x1x16xf32>
    %95 = vector.shape_cast %94 : vector<1x1x1x16xf32> to vector<1x16xf32>
    %96 = vector.shape_cast %84 : vector<1x16xf32> to vector<1x1x1x16xf32>
    tpu.vector_store %arg5[%c0_15, %c1_16, %c17_17, %c0_18], %96 {strides = array<i32>} : memref<3x3x18x16xf32, #tpu.memory_space<vmem>>, vector<1x1x1x16xf32>,
    %c0_19 = arith.constant 0 : index
    %c2_20 = arith.constant 2 : index
    %c0_21 = arith.constant 0 : index
    %c0_22 = arith.constant 0 : index
    %97 = vector.load %arg5[%c0_19, %c2_20, %c0_21, %c0_22] : memref<3x3x18x16xf32, #tpu.memory_space<vmem>>, vector<1x1x1x16xf32>
    %98 = vector.shape_cast %97 : vector<1x1x1x16xf32> to vector<1x16xf32>
    %99 = vector.shape_cast %84 : vector<1x16xf32> to vector<1x1x1x16xf32>
    tpu.vector_store %arg5[%c0_19, %c2_20, %c0_21, %c0_22], %99 {strides = array<i32>} : memref<3x3x18x16xf32, #tpu.memory_space<vmem>>, vector<1x1x1x16xf32>,
    %c0_23 = arith.constant 0 : index
    %c2_24 = arith.constant 2 : index
    %c17_25 = arith.constant 17 : index
    %c0_26 = arith.constant 0 : index
    %100 = vector.load %arg5[%c0_23, %c2_24, %c17_25, %c0_26] : memref<3x3x18x16xf32, #tpu.memory_space<vmem>>, vector<1x1x1x16xf32>
    %101 = vector.shape_cast %100 : vector<1x1x1x16xf32> to vector<1x16xf32>
    %102 = vector.shape_cast %84 : vector<1x16xf32> to vector<1x1x1x16xf32>
    tpu.vector_store %arg5[%c0_23, %c2_24, %c17_25, %c0_26], %102 {strides = array<i32>} : memref<3x3x18x16xf32, #tpu.memory_space<vmem>>, vector<1x1x1x16xf32>,
    %c1_27 = arith.constant 1 : index
    %c0_28 = arith.constant 0 : index
    %c0_29 = arith.constant 0 : index
    %c0_30 = arith.constant 0 : index
    %103 = vector.load %arg5[%c1_27, %c0_28, %c0_29, %c0_30] : memref<3x3x18x16xf32, #tpu.memory_space<vmem>>, vector<1x1x1x16xf32>
    %104 = vector.shape_cast %103 : vector<1x1x1x16xf32> to vector<1x16xf32>
    %105 = vector.shape_cast %84 : vector<1x16xf32> to vector<1x1x1x16xf32>
    tpu.vector_store %arg5[%c1_27, %c0_28, %c0_29, %c0_30], %105 {strides = array<i32>} : memref<3x3x18x16xf32, #tpu.memory_space<vmem>>, vector<1x1x1x16xf32>,
    %c1_31 = arith.constant 1 : index
    %c0_32 = arith.constant 0 : index
    %c17_33 = arith.constant 17 : index
    %c0_34 = arith.constant 0 : index
    %106 = vector.load %arg5[%c1_31, %c0_32, %c17_33, %c0_34] : memref<3x3x18x16xf32, #tpu.memory_space<vmem>>, vector<1x1x1x16xf32>
    %107 = vector.shape_cast %106 : vector<1x1x1x16xf32> to vector<1x16xf32>
    %108 = vector.shape_cast %84 : vector<1x16xf32> to vector<1x1x1x16xf32>
    tpu.vector_store %arg5[%c1_31, %c0_32, %c17_33, %c0_34], %108 {strides = array<i32>} : memref<3x3x18x16xf32, #tpu.memory_space<vmem>>, vector<1x1x1x16xf32>,
    %c1_35 = arith.constant 1 : index
    %c1_36 = arith.constant 1 : index
    %c0_37 = arith.constant 0 : index
    %c0_38 = arith.constant 0 : index
    %109 = vector.load %arg5[%c1_35, %c1_36, %c0_37, %c0_38] : memref<3x3x18x16xf32, #tpu.memory_space<vmem>>, vector<1x1x1x16xf32>
    %110 = vector.shape_cast %109 : vector<1x1x1x16xf32> to vector<1x16xf32>
    %111 = vector.shape_cast %84 : vector<1x16xf32> to vector<1x1x1x16xf32>
    tpu.vector_store %arg5[%c1_35, %c1_36, %c0_37, %c0_38], %111 {strides = array<i32>} : memref<3x3x18x16xf32, #tpu.memory_space<vmem>>, vector<1x1x1x16xf32>,
    %c1_39 = arith.constant 1 : index
    %c1_40 = arith.constant 1 : index
    %c17_41 = arith.constant 17 : index
    %c0_42 = arith.constant 0 : index
    %112 = vector.load %arg5[%c1_39, %c1_40, %c17_41, %c0_42] : memref<3x3x18x16xf32, #tpu.memory_space<vmem>>, vector<1x1x1x16xf32>
    %113 = vector.shape_cast %112 : vector<1x1x1x16xf32> to vector<1x16xf32>
    %114 = vector.shape_cast %84 : vector<1x16xf32> to vector<1x1x1x16xf32>
    tpu.vector_store %arg5[%c1_39, %c1_40, %c17_41, %c0_42], %114 {strides = array<i32>} : memref<3x3x18x16xf32, #tpu.memory_space<vmem>>, vector<1x1x1x16xf32>,
    %c1_43 = arith.constant 1 : index
    %c2_44 = arith.constant 2 : index
    %c0_45 = arith.constant 0 : index
    %c0_46 = arith.constant 0 : index
    %115 = vector.load %arg5[%c1_43, %c2_44, %c0_45, %c0_46] : memref<3x3x18x16xf32, #tpu.memory_space<vmem>>, vector<1x1x1x16xf32>
    %116 = vector.shape_cast %115 : vector<1x1x1x16xf32> to vector<1x16xf32>
    %117 = vector.shape_cast %84 : vector<1x16xf32> to vector<1x1x1x16xf32>
    tpu.vector_store %arg5[%c1_43, %c2_44, %c0_45, %c0_46], %117 {strides = array<i32>} : memref<3x3x18x16xf32, #tpu.memory_space<vmem>>, vector<1x1x1x16xf32>,
    %c1_47 = arith.constant 1 : index
    %c2_48 = arith.constant 2 : index
    %c17_49 = arith.constant 17 : index
    %c0_50 = arith.constant 0 : index
    %118 = vector.load %arg5[%c1_47, %c2_48, %c17_49, %c0_50] : memref<3x3x18x16xf32, #tpu.memory_space<vmem>>, vector<1x1x1x16xf32>
    %119 = vector.shape_cast %118 : vector<1x1x1x16xf32> to vector<1x16xf32>
    %120 = vector.shape_cast %84 : vector<1x16xf32> to vector<1x1x1x16xf32>
    tpu.vector_store %arg5[%c1_47, %c2_48, %c17_49, %c0_50], %120 {strides = array<i32>} : memref<3x3x18x16xf32, #tpu.memory_space<vmem>>, vector<1x1x1x16xf32>,
    %c2_51 = arith.constant 2 : index
    %c0_52 = arith.constant 0 : index
    %c0_53 = arith.constant 0 : index
    %c0_54 = arith.constant 0 : index
    %121 = vector.load %arg5[%c2_51, %c0_52, %c0_53, %c0_54] : memref<3x3x18x16xf32, #tpu.memory_space<vmem>>, vector<1x1x1x16xf32>
    %122 = vector.shape_cast %121 : vector<1x1x1x16xf32> to vector<1x16xf32>
    %123 = vector.shape_cast %84 : vector<1x16xf32> to vector<1x1x1x16xf32>
    tpu.vector_store %arg5[%c2_51, %c0_52, %c0_53, %c0_54], %123 {strides = array<i32>} : memref<3x3x18x16xf32, #tpu.memory_space<vmem>>, vector<1x1x1x16xf32>,
    %c2_55 = arith.constant 2 : index
    %c0_56 = arith.constant 0 : index
    %c17_57 = arith.constant 17 : index
    %c0_58 = arith.constant 0 : index
    %124 = vector.load %arg5[%c2_55, %c0_56, %c17_57, %c0_58] : memref<3x3x18x16xf32, #tpu.memory_space<vmem>>, vector<1x1x1x16xf32>
    %125 = vector.shape_cast %124 : vector<1x1x1x16xf32> to vector<1x16xf32>
    %126 = vector.shape_cast %84 : vector<1x16xf32> to vector<1x1x1x16xf32>
    tpu.vector_store %arg5[%c2_55, %c0_56, %c17_57, %c0_58], %126 {strides = array<i32>} : memref<3x3x18x16xf32, #tpu.memory_space<vmem>>, vector<1x1x1x16xf32>,
    %c2_59 = arith.constant 2 : index
    %c1_60 = arith.constant 1 : index
    %c0_61 = arith.constant 0 : index
    %c0_62 = arith.constant 0 : index
    %127 = vector.load %arg5[%c2_59, %c1_60, %c0_61, %c0_62] : memref<3x3x18x16xf32, #tpu.memory_space<vmem>>, vector<1x1x1x16xf32>
    %128 = vector.shape_cast %127 : vector<1x1x1x16xf32> to vector<1x16xf32>
    %129 = vector.shape_cast %84 : vector<1x16xf32> to vector<1x1x1x16xf32>
    tpu.vector_store %arg5[%c2_59, %c1_60, %c0_61, %c0_62], %129 {strides = array<i32>} : memref<3x3x18x16xf32, #tpu.memory_space<vmem>>, vector<1x1x1x16xf32>,
    %c2_63 = arith.constant 2 : index
    %c1_64 = arith.constant 1 : index
    %c17_65 = arith.constant 17 : index
    %c0_66 = arith.constant 0 : index
    %130 = vector.load %arg5[%c2_63, %c1_64, %c17_65, %c0_66] : memref<3x3x18x16xf32, #tpu.memory_space<vmem>>, vector<1x1x1x16xf32>
    %131 = vector.shape_cast %130 : vector<1x1x1x16xf32> to vector<1x16xf32>
    %132 = vector.shape_cast %84 : vector<1x16xf32> to vector<1x1x1x16xf32>
    tpu.vector_store %arg5[%c2_63, %c1_64, %c17_65, %c0_66], %132 {strides = array<i32>} : memref<3x3x18x16xf32, #tpu.memory_space<vmem>>, vector<1x1x1x16xf32>,
    %c2_67 = arith.constant 2 : index
    %c2_68 = arith.constant 2 : index
    %c0_69 = arith.constant 0 : index
    %c0_70 = arith.constant 0 : index
    %133 = vector.load %arg5[%c2_67, %c2_68, %c0_69, %c0_70] : memref<3x3x18x16xf32, #tpu.memory_space<vmem>>, vector<1x1x1x16xf32>
    %134 = vector.shape_cast %133 : vector<1x1x1x16xf32> to vector<1x16xf32>
    %135 = vector.shape_cast %84 : vector<1x16xf32> to vector<1x1x1x16xf32>
    tpu.vector_store %arg5[%c2_67, %c2_68, %c0_69, %c0_70], %135 {strides = array<i32>} : memref<3x3x18x16xf32, #tpu.memory_space<vmem>>, vector<1x1x1x16xf32>,
    %c2_71 = arith.constant 2 : index
    %c2_72 = arith.constant 2 : index
    %c17_73 = arith.constant 17 : index
    %c0_74 = arith.constant 0 : index
    %136 = vector.load %arg5[%c2_71, %c2_72, %c17_73, %c0_74] : memref<3x3x18x16xf32, #tpu.memory_space<vmem>>, vector<1x1x1x16xf32>
    %137 = vector.shape_cast %136 : vector<1x1x1x16xf32> to vector<1x16xf32>
    %138 = vector.shape_cast %84 : vector<1x16xf32> to vector<1x1x1x16xf32>
    tpu.vector_store %arg5[%c2_71, %c2_72, %c17_73, %c0_74], %138 {strides = array<i32>} : memref<3x3x18x16xf32, #tpu.memory_space<vmem>>, vector<1x1x1x16xf32>,
    %c0_75 = arith.constant 0 : index
    %c0_76 = arith.constant 0 : index
    %c0_77 = arith.constant 0 : index
    %c0_78 = arith.constant 0 : index
    %139 = vector.load %arg3[%c0_75, %c0_76, %c0_77, %c0_78] : memref<1x3x16x16xf32, #tpu.memory_space<vmem>>, vector<1x1x16x16xf32>
    %140 = vector.shape_cast %139 : vector<1x1x16x16xf32> to vector<16x16xf32>
    %cst_79 = arith.constant 0.000000e+00 : f32
    %141 = vector.broadcast %cst_79 : f32 to vector<16x1xf32>
    %142 = vector.extract_strided_slice %140 {offsets = [0, 0], sizes = [16, 15], strides = [1, 1]} : vector<16x16xf32> to vector<16x15xf32>
    %143 = tpu.concatenate %141, %142 in 1 : vector<16x1xf32>, vector<16x15xf32> -> vector<16x16xf32>
    %144 = vector.extract_strided_slice %140 {offsets = [0, 1], sizes = [16, 15], strides = [1, 1]} : vector<16x16xf32> to vector<16x15xf32>
    %145 = tpu.concatenate %144, %141 in 1 : vector<16x15xf32>, vector<16x1xf32> -> vector<16x16xf32>
    %c0_80 = arith.constant 0 : index
    %c0_81 = arith.constant 0 : index
    %c1_82 = arith.constant 1 : index
    %c0_83 = arith.constant 0 : index
    %146 = vector.load %arg5[%c0_80, %c0_81, %c1_82, %c0_83] : memref<3x3x18x16xf32, #tpu.memory_space<vmem>>, vector<1x1x16x16xf32>
    %147 = vector.shape_cast %146 : vector<1x1x16x16xf32> to vector<16x16xf32>
    %148 = vector.shape_cast %143 : vector<16x16xf32> to vector<1x1x16x16xf32>
    tpu.vector_store %arg5[%c0_80, %c0_81, %c1_82, %c0_83], %148 {strides = array<i32>} : memref<3x3x18x16xf32, #tpu.memory_space<vmem>>, vector<1x1x16x16xf32>,
    %c0_84 = arith.constant 0 : index
    %c1_85 = arith.constant 1 : index
    %c1_86 = arith.constant 1 : index
    %c0_87 = arith.constant 0 : index
    %149 = vector.load %arg5[%c0_84, %c1_85, %c1_86, %c0_87] : memref<3x3x18x16xf32, #tpu.memory_space<vmem>>, vector<1x1x16x16xf32>
    %150 = vector.shape_cast %149 : vector<1x1x16x16xf32> to vector<16x16xf32>
    %151 = vector.shape_cast %140 : vector<16x16xf32> to vector<1x1x16x16xf32>
    tpu.vector_store %arg5[%c0_84, %c1_85, %c1_86, %c0_87], %151 {strides = array<i32>} : memref<3x3x18x16xf32, #tpu.memory_space<vmem>>, vector<1x1x16x16xf32>,
    %c0_88 = arith.constant 0 : index
    %c2_89 = arith.constant 2 : index
    %c1_90 = arith.constant 1 : index
    %c0_91 = arith.constant 0 : index
    %152 = vector.load %arg5[%c0_88, %c2_89, %c1_90, %c0_91] : memref<3x3x18x16xf32, #tpu.memory_space<vmem>>, vector<1x1x16x16xf32>
    %153 = vector.shape_cast %152 : vector<1x1x16x16xf32> to vector<16x16xf32>
    %154 = vector.shape_cast %145 : vector<16x16xf32> to vector<1x1x16x16xf32>
    tpu.vector_store %arg5[%c0_88, %c2_89, %c1_90, %c0_91], %154 {strides = array<i32>} : memref<3x3x18x16xf32, #tpu.memory_space<vmem>>, vector<1x1x16x16xf32>,
    %c0_92 = arith.constant 0 : index
    %c1_93 = arith.constant 1 : index
    %c0_94 = arith.constant 0 : index
    %c0_95 = arith.constant 0 : index
    %155 = vector.load %arg3[%c0_92, %c1_93, %c0_94, %c0_95] : memref<1x3x16x16xf32, #tpu.memory_space<vmem>>, vector<1x1x16x16xf32>
    %156 = vector.shape_cast %155 : vector<1x1x16x16xf32> to vector<16x16xf32>
    %cst_96 = arith.constant 0.000000e+00 : f32
    %157 = vector.broadcast %cst_96 : f32 to vector<16x1xf32>
    %158 = vector.extract_strided_slice %156 {offsets = [0, 0], sizes = [16, 15], strides = [1, 1]} : vector<16x16xf32> to vector<16x15xf32>
    %159 = tpu.concatenate %157, %158 in 1 : vector<16x1xf32>, vector<16x15xf32> -> vector<16x16xf32>
    %160 = vector.extract_strided_slice %156 {offsets = [0, 1], sizes = [16, 15], strides = [1, 1]} : vector<16x16xf32> to vector<16x15xf32>
    %161 = tpu.concatenate %160, %157 in 1 : vector<16x15xf32>, vector<16x1xf32> -> vector<16x16xf32>
    %c1_97 = arith.constant 1 : index
    %c0_98 = arith.constant 0 : index
    %c1_99 = arith.constant 1 : index
    %c0_100 = arith.constant 0 : index
    %162 = vector.load %arg5[%c1_97, %c0_98, %c1_99, %c0_100] : memref<3x3x18x16xf32, #tpu.memory_space<vmem>>, vector<1x1x16x16xf32>
    %163 = vector.shape_cast %162 : vector<1x1x16x16xf32> to vector<16x16xf32>
    %164 = vector.shape_cast %159 : vector<16x16xf32> to vector<1x1x16x16xf32>
    tpu.vector_store %arg5[%c1_97, %c0_98, %c1_99, %c0_100], %164 {strides = array<i32>} : memref<3x3x18x16xf32, #tpu.memory_space<vmem>>, vector<1x1x16x16xf32>,
    %c1_101 = arith.constant 1 : index
    %c1_102 = arith.constant 1 : index
    %c1_103 = arith.constant 1 : index
    %c0_104 = arith.constant 0 : index
    %165 = vector.load %arg5[%c1_101, %c1_102, %c1_103, %c0_104] : memref<3x3x18x16xf32, #tpu.memory_space<vmem>>, vector<1x1x16x16xf32>
    %166 = vector.shape_cast %165 : vector<1x1x16x16xf32> to vector<16x16xf32>
    %167 = vector.shape_cast %156 : vector<16x16xf32> to vector<1x1x16x16xf32>
    tpu.vector_store %arg5[%c1_101, %c1_102, %c1_103, %c0_104], %167 {strides = array<i32>} : memref<3x3x18x16xf32, #tpu.memory_space<vmem>>, vector<1x1x16x16xf32>,
    %c1_105 = arith.constant 1 : index
    %c2_106 = arith.constant 2 : index
    %c1_107 = arith.constant 1 : index
    %c0_108 = arith.constant 0 : index
    %168 = vector.load %arg5[%c1_105, %c2_106, %c1_107, %c0_108] : memref<3x3x18x16xf32, #tpu.memory_space<vmem>>, vector<1x1x16x16xf32>
    %169 = vector.shape_cast %168 : vector<1x1x16x16xf32> to vector<16x16xf32>
    %170 = vector.shape_cast %161 : vector<16x16xf32> to vector<1x1x16x16xf32>
    tpu.vector_store %arg5[%c1_105, %c2_106, %c1_107, %c0_108], %170 {strides = array<i32>} : memref<3x3x18x16xf32, #tpu.memory_space<vmem>>, vector<1x1x16x16xf32>,
    %c0_109 = arith.constant 0 : index
    %c2_110 = arith.constant 2 : index
    %c0_111 = arith.constant 0 : index
    %c0_112 = arith.constant 0 : index
    %171 = vector.load %arg3[%c0_109, %c2_110, %c0_111, %c0_112] : memref<1x3x16x16xf32, #tpu.memory_space<vmem>>, vector<1x1x16x16xf32>
    %172 = vector.shape_cast %171 : vector<1x1x16x16xf32> to vector<16x16xf32>
    %cst_113 = arith.constant 0.000000e+00 : f32
    %173 = vector.broadcast %cst_113 : f32 to vector<16x1xf32>
    %174 = vector.extract_strided_slice %172 {offsets = [0, 0], sizes = [16, 15], strides = [1, 1]} : vector<16x16xf32> to vector<16x15xf32>
    %175 = tpu.concatenate %173, %174 in 1 : vector<16x1xf32>, vector<16x15xf32> -> vector<16x16xf32>
    %176 = vector.extract_strided_slice %172 {offsets = [0, 1], sizes = [16, 15], strides = [1, 1]} : vector<16x16xf32> to vector<16x15xf32>
    %177 = tpu.concatenate %176, %173 in 1 : vector<16x15xf32>, vector<16x1xf32> -> vector<16x16xf32>
    %c2_114 = arith.constant 2 : index
    %c0_115 = arith.constant 0 : index
    %c1_116 = arith.constant 1 : index
    %c0_117 = arith.constant 0 : index
    %178 = vector.load %arg5[%c2_114, %c0_115, %c1_116, %c0_117] : memref<3x3x18x16xf32, #tpu.memory_space<vmem>>, vector<1x1x16x16xf32>
    %179 = vector.shape_cast %178 : vector<1x1x16x16xf32> to vector<16x16xf32>
    %180 = vector.shape_cast %175 : vector<16x16xf32> to vector<1x1x16x16xf32>
    tpu.vector_store %arg5[%c2_114, %c0_115, %c1_116, %c0_117], %180 {strides = array<i32>} : memref<3x3x18x16xf32, #tpu.memory_space<vmem>>, vector<1x1x16x16xf32>,
    %c2_118 = arith.constant 2 : index
    %c1_119 = arith.constant 1 : index
    %c1_120 = arith.constant 1 : index
    %c0_121 = arith.constant 0 : index
    %181 = vector.load %arg5[%c2_118, %c1_119, %c1_120, %c0_121] : memref<3x3x18x16xf32, #tpu.memory_space<vmem>>, vector<1x1x16x16xf32>
    %182 = vector.shape_cast %181 : vector<1x1x16x16xf32> to vector<16x16xf32>
    %183 = vector.shape_cast %172 : vector<16x16xf32> to vector<1x1x16x16xf32>
    tpu.vector_store %arg5[%c2_118, %c1_119, %c1_120, %c0_121], %183 {strides = array<i32>} : memref<3x3x18x16xf32, #tpu.memory_space<vmem>>, vector<1x1x16x16xf32>,
    %c2_122 = arith.constant 2 : index
    %c2_123 = arith.constant 2 : index
    %c1_124 = arith.constant 1 : index
    %c0_125 = arith.constant 0 : index
    %184 = vector.load %arg5[%c2_122, %c2_123, %c1_124, %c0_125] : memref<3x3x18x16xf32, #tpu.memory_space<vmem>>, vector<1x1x16x16xf32>
    %185 = vector.shape_cast %184 : vector<1x1x16x16xf32> to vector<16x16xf32>
    %186 = vector.shape_cast %177 : vector<16x16xf32> to vector<1x1x16x16xf32>
    tpu.vector_store %arg5[%c2_122, %c2_123, %c1_124, %c0_125], %186 {strides = array<i32>} : memref<3x3x18x16xf32, #tpu.memory_space<vmem>>, vector<1x1x16x16xf32>,
    %187 = vector.broadcast %81 : f32 to vector<16x16xf32>
    %188 = vector.broadcast %82 : f32 to vector<16x16xf32>
    %189 = vector.broadcast %83 : f32 to vector<16x16xf32>
    %c0_126 = arith.constant 0 : index
    %c0_127 = arith.constant 0 : index
    %c0_128 = arith.constant 0 : index
    %c0_129 = arith.constant 0 : index
    %190 = vector.load %arg5[%c0_126, %c0_127, %c0_128, %c0_129] : memref<3x3x18x16xf32, #tpu.memory_space<vmem>>, vector<1x1x16x16xf32>
    %191 = vector.shape_cast %190 : vector<1x1x16x16xf32> to vector<16x16xf32>
    %192 = vector.broadcast %0 : f32 to vector<16x16xf32>
    %193 = arith.mulf %192, %191 : vector<16x16xf32>
    %194 = arith.addf %187, %193 : vector<16x16xf32>
    %195 = vector.broadcast %27 : f32 to vector<16x16xf32>
    %196 = arith.mulf %195, %191 : vector<16x16xf32>
    %197 = arith.addf %188, %196 : vector<16x16xf32>
    %198 = vector.broadcast %54 : f32 to vector<16x16xf32>
    %199 = arith.mulf %198, %191 : vector<16x16xf32>
    %200 = arith.addf %189, %199 : vector<16x16xf32>
    %c0_130 = arith.constant 0 : index
    %c0_131 = arith.constant 0 : index
    %c1_132 = arith.constant 1 : index
    %c0_133 = arith.constant 0 : index
    %201 = vector.load %arg5[%c0_130, %c0_131, %c1_132, %c0_133] : memref<3x3x18x16xf32, #tpu.memory_space<vmem>>, vector<1x1x16x16xf32>
    %202 = vector.shape_cast %201 : vector<1x1x16x16xf32> to vector<16x16xf32>
    %203 = vector.broadcast %3 : f32 to vector<16x16xf32>
    %204 = arith.mulf %203, %202 : vector<16x16xf32>
    %205 = arith.addf %194, %204 : vector<16x16xf32>
    %206 = vector.broadcast %30 : f32 to vector<16x16xf32>
    %207 = arith.mulf %206, %202 : vector<16x16xf32>
    %208 = arith.addf %197, %207 : vector<16x16xf32>
    %209 = vector.broadcast %57 : f32 to vector<16x16xf32>
    %210 = arith.mulf %209, %202 : vector<16x16xf32>
    %211 = arith.addf %200, %210 : vector<16x16xf32>
    %c0_134 = arith.constant 0 : index
    %c0_135 = arith.constant 0 : index
    %c2_136 = arith.constant 2 : index
    %c0_137 = arith.constant 0 : index
    %212 = vector.load %arg5[%c0_134, %c0_135, %c2_136, %c0_137] : memref<3x3x18x16xf32, #tpu.memory_space<vmem>>, vector<1x1x16x16xf32>
    %213 = vector.shape_cast %212 : vector<1x1x16x16xf32> to vector<16x16xf32>
    %214 = vector.broadcast %6 : f32 to vector<16x16xf32>
    %215 = arith.mulf %214, %213 : vector<16x16xf32>
    %216 = arith.addf %205, %215 : vector<16x16xf32>
    %217 = vector.broadcast %33 : f32 to vector<16x16xf32>
    %218 = arith.mulf %217, %213 : vector<16x16xf32>
    %219 = arith.addf %208, %218 : vector<16x16xf32>
    %220 = vector.broadcast %60 : f32 to vector<16x16xf32>
    %221 = arith.mulf %220, %213 : vector<16x16xf32>
    %222 = arith.addf %211, %221 : vector<16x16xf32>
    %c0_138 = arith.constant 0 : index
    %c1_139 = arith.constant 1 : index
    %c0_140 = arith.constant 0 : index
    %c0_141 = arith.constant 0 : index
    %223 = vector.load %arg5[%c0_138, %c1_139, %c0_140, %c0_141] : memref<3x3x18x16xf32, #tpu.memory_space<vmem>>, vector<1x1x16x16xf32>
    %224 = vector.shape_cast %223 : vector<1x1x16x16xf32> to vector<16x16xf32>
    %225 = vector.broadcast %1 : f32 to vector<16x16xf32>
    %226 = arith.mulf %225, %224 : vector<16x16xf32>
    %227 = arith.addf %216, %226 : vector<16x16xf32>
    %228 = vector.broadcast %28 : f32 to vector<16x16xf32>
    %229 = arith.mulf %228, %224 : vector<16x16xf32>
    %230 = arith.addf %219, %229 : vector<16x16xf32>
    %231 = vector.broadcast %55 : f32 to vector<16x16xf32>
    %232 = arith.mulf %231, %224 : vector<16x16xf32>
    %233 = arith.addf %222, %232 : vector<16x16xf32>
    %c0_142 = arith.constant 0 : index
    %c1_143 = arith.constant 1 : index
    %c1_144 = arith.constant 1 : index
    %c0_145 = arith.constant 0 : index
    %234 = vector.load %arg5[%c0_142, %c1_143, %c1_144, %c0_145] : memref<3x3x18x16xf32, #tpu.memory_space<vmem>>, vector<1x1x16x16xf32>
    %235 = vector.shape_cast %234 : vector<1x1x16x16xf32> to vector<16x16xf32>
    %236 = vector.broadcast %4 : f32 to vector<16x16xf32>
    %237 = arith.mulf %236, %235 : vector<16x16xf32>
    %238 = arith.addf %227, %237 : vector<16x16xf32>
    %239 = vector.broadcast %31 : f32 to vector<16x16xf32>
    %240 = arith.mulf %239, %235 : vector<16x16xf32>
    %241 = arith.addf %230, %240 : vector<16x16xf32>
    %242 = vector.broadcast %58 : f32 to vector<16x16xf32>
    %243 = arith.mulf %242, %235 : vector<16x16xf32>
    %244 = arith.addf %233, %243 : vector<16x16xf32>
    %c0_146 = arith.constant 0 : index
    %c1_147 = arith.constant 1 : index
    %c2_148 = arith.constant 2 : index
    %c0_149 = arith.constant 0 : index
    %245 = vector.load %arg5[%c0_146, %c1_147, %c2_148, %c0_149] : memref<3x3x18x16xf32, #tpu.memory_space<vmem>>, vector<1x1x16x16xf32>
    %246 = vector.shape_cast %245 : vector<1x1x16x16xf32> to vector<16x16xf32>
    %247 = vector.broadcast %7 : f32 to vector<16x16xf32>
    %248 = arith.mulf %247, %246 : vector<16x16xf32>
    %249 = arith.addf %238, %248 : vector<16x16xf32>
    %250 = vector.broadcast %34 : f32 to vector<16x16xf32>
    %251 = arith.mulf %250, %246 : vector<16x16xf32>
    %252 = arith.addf %241, %251 : vector<16x16xf32>
    %253 = vector.broadcast %61 : f32 to vector<16x16xf32>
    %254 = arith.mulf %253, %246 : vector<16x16xf32>
    %255 = arith.addf %244, %254 : vector<16x16xf32>
    %c0_150 = arith.constant 0 : index
    %c2_151 = arith.constant 2 : index
    %c0_152 = arith.constant 0 : index
    %c0_153 = arith.constant 0 : index
    %256 = vector.load %arg5[%c0_150, %c2_151, %c0_152, %c0_153] : memref<3x3x18x16xf32, #tpu.memory_space<vmem>>, vector<1x1x16x16xf32>
    %257 = vector.shape_cast %256 : vector<1x1x16x16xf32> to vector<16x16xf32>
    %258 = vector.broadcast %2 : f32 to vector<16x16xf32>
    %259 = arith.mulf %258, %257 : vector<16x16xf32>
    %260 = arith.addf %249, %259 : vector<16x16xf32>
    %261 = vector.broadcast %29 : f32 to vector<16x16xf32>
    %262 = arith.mulf %261, %257 : vector<16x16xf32>
    %263 = arith.addf %252, %262 : vector<16x16xf32>
    %264 = vector.broadcast %56 : f32 to vector<16x16xf32>
    %265 = arith.mulf %264, %257 : vector<16x16xf32>
    %266 = arith.addf %255, %265 : vector<16x16xf32>
    %c0_154 = arith.constant 0 : index
    %c2_155 = arith.constant 2 : index
    %c1_156 = arith.constant 1 : index
    %c0_157 = arith.constant 0 : index
    %267 = vector.load %arg5[%c0_154, %c2_155, %c1_156, %c0_157] : memref<3x3x18x16xf32, #tpu.memory_space<vmem>>, vector<1x1x16x16xf32>
    %268 = vector.shape_cast %267 : vector<1x1x16x16xf32> to vector<16x16xf32>
    %269 = vector.broadcast %5 : f32 to vector<16x16xf32>
    %270 = arith.mulf %269, %268 : vector<16x16xf32>
    %271 = arith.addf %260, %270 : vector<16x16xf32>
    %272 = vector.broadcast %32 : f32 to vector<16x16xf32>
    %273 = arith.mulf %272, %268 : vector<16x16xf32>
    %274 = arith.addf %263, %273 : vector<16x16xf32>
    %275 = vector.broadcast %59 : f32 to vector<16x16xf32>
    %276 = arith.mulf %275, %268 : vector<16x16xf32>
    %277 = arith.addf %266, %276 : vector<16x16xf32>
    %c0_158 = arith.constant 0 : index
    %c2_159 = arith.constant 2 : index
    %c2_160 = arith.constant 2 : index
    %c0_161 = arith.constant 0 : index
    %278 = vector.load %arg5[%c0_158, %c2_159, %c2_160, %c0_161] : memref<3x3x18x16xf32, #tpu.memory_space<vmem>>, vector<1x1x16x16xf32>
    %279 = vector.shape_cast %278 : vector<1x1x16x16xf32> to vector<16x16xf32>
    %280 = vector.broadcast %8 : f32 to vector<16x16xf32>
    %281 = arith.mulf %280, %279 : vector<16x16xf32>
    %282 = arith.addf %271, %281 : vector<16x16xf32>
    %283 = vector.broadcast %35 : f32 to vector<16x16xf32>
    %284 = arith.mulf %283, %279 : vector<16x16xf32>
    %285 = arith.addf %274, %284 : vector<16x16xf32>
    %286 = vector.broadcast %62 : f32 to vector<16x16xf32>
    %287 = arith.mulf %286, %279 : vector<16x16xf32>
    %288 = arith.addf %277, %287 : vector<16x16xf32>
    %c1_162 = arith.constant 1 : index
    %c0_163 = arith.constant 0 : index
    %c0_164 = arith.constant 0 : index
    %c0_165 = arith.constant 0 : index
    %289 = vector.load %arg5[%c1_162, %c0_163, %c0_164, %c0_165] : memref<3x3x18x16xf32, #tpu.memory_space<vmem>>, vector<1x1x16x16xf32>
    %290 = vector.shape_cast %289 : vector<1x1x16x16xf32> to vector<16x16xf32>
    %291 = vector.broadcast %9 : f32 to vector<16x16xf32>
    %292 = arith.mulf %291, %290 : vector<16x16xf32>
    %293 = arith.addf %282, %292 : vector<16x16xf32>
    %294 = vector.broadcast %36 : f32 to vector<16x16xf32>
    %295 = arith.mulf %294, %290 : vector<16x16xf32>
    %296 = arith.addf %285, %295 : vector<16x16xf32>
    %297 = vector.broadcast %63 : f32 to vector<16x16xf32>
    %298 = arith.mulf %297, %290 : vector<16x16xf32>
    %299 = arith.addf %288, %298 : vector<16x16xf32>
    %c1_166 = arith.constant 1 : index
    %c0_167 = arith.constant 0 : index
    %c1_168 = arith.constant 1 : index
    %c0_169 = arith.constant 0 : index
    %300 = vector.load %arg5[%c1_166, %c0_167, %c1_168, %c0_169] : memref<3x3x18x16xf32, #tpu.memory_space<vmem>>, vector<1x1x16x16xf32>
    %301 = vector.shape_cast %300 : vector<1x1x16x16xf32> to vector<16x16xf32>
    %302 = vector.broadcast %12 : f32 to vector<16x16xf32>
    %303 = arith.mulf %302, %301 : vector<16x16xf32>
    %304 = arith.addf %293, %303 : vector<16x16xf32>
    %305 = vector.broadcast %39 : f32 to vector<16x16xf32>
    %306 = arith.mulf %305, %301 : vector<16x16xf32>
    %307 = arith.addf %296, %306 : vector<16x16xf32>
    %308 = vector.broadcast %66 : f32 to vector<16x16xf32>
    %309 = arith.mulf %308, %301 : vector<16x16xf32>
    %310 = arith.addf %299, %309 : vector<16x16xf32>
    %c1_170 = arith.constant 1 : index
    %c0_171 = arith.constant 0 : index
    %c2_172 = arith.constant 2 : index
    %c0_173 = arith.constant 0 : index
    %311 = vector.load %arg5[%c1_170, %c0_171, %c2_172, %c0_173] : memref<3x3x18x16xf32, #tpu.memory_space<vmem>>, vector<1x1x16x16xf32>
    %312 = vector.shape_cast %311 : vector<1x1x16x16xf32> to vector<16x16xf32>
    %313 = vector.broadcast %15 : f32 to vector<16x16xf32>
    %314 = arith.mulf %313, %312 : vector<16x16xf32>
    %315 = arith.addf %304, %314 : vector<16x16xf32>
    %316 = vector.broadcast %42 : f32 to vector<16x16xf32>
    %317 = arith.mulf %316, %312 : vector<16x16xf32>
    %318 = arith.addf %307, %317 : vector<16x16xf32>
    %319 = vector.broadcast %69 : f32 to vector<16x16xf32>
    %320 = arith.mulf %319, %312 : vector<16x16xf32>
    %321 = arith.addf %310, %320 : vector<16x16xf32>
    %c1_174 = arith.constant 1 : index
    %c1_175 = arith.constant 1 : index
    %c0_176 = arith.constant 0 : index
    %c0_177 = arith.constant 0 : index
    %322 = vector.load %arg5[%c1_174, %c1_175, %c0_176, %c0_177] : memref<3x3x18x16xf32, #tpu.memory_space<vmem>>, vector<1x1x16x16xf32>
    %323 = vector.shape_cast %322 : vector<1x1x16x16xf32> to vector<16x16xf32>
    %324 = vector.broadcast %10 : f32 to vector<16x16xf32>
    %325 = arith.mulf %324, %323 : vector<16x16xf32>
    %326 = arith.addf %315, %325 : vector<16x16xf32>
    %327 = vector.broadcast %37 : f32 to vector<16x16xf32>
    %328 = arith.mulf %327, %323 : vector<16x16xf32>
    %329 = arith.addf %318, %328 : vector<16x16xf32>
    %330 = vector.broadcast %64 : f32 to vector<16x16xf32>
    %331 = arith.mulf %330, %323 : vector<16x16xf32>
    %332 = arith.addf %321, %331 : vector<16x16xf32>
    %c1_178 = arith.constant 1 : index
    %c1_179 = arith.constant 1 : index
    %c1_180 = arith.constant 1 : index
    %c0_181 = arith.constant 0 : index
    %333 = vector.load %arg5[%c1_178, %c1_179, %c1_180, %c0_181] : memref<3x3x18x16xf32, #tpu.memory_space<vmem>>, vector<1x1x16x16xf32>
    %334 = vector.shape_cast %333 : vector<1x1x16x16xf32> to vector<16x16xf32>
    %335 = vector.broadcast %13 : f32 to vector<16x16xf32>
    %336 = arith.mulf %335, %334 : vector<16x16xf32>
    %337 = arith.addf %326, %336 : vector<16x16xf32>
    %338 = vector.broadcast %40 : f32 to vector<16x16xf32>
    %339 = arith.mulf %338, %334 : vector<16x16xf32>
    %340 = arith.addf %329, %339 : vector<16x16xf32>
    %341 = vector.broadcast %67 : f32 to vector<16x16xf32>
    %342 = arith.mulf %341, %334 : vector<16x16xf32>
    %343 = arith.addf %332, %342 : vector<16x16xf32>
    %c1_182 = arith.constant 1 : index
    %c1_183 = arith.constant 1 : index
    %c2_184 = arith.constant 2 : index
    %c0_185 = arith.constant 0 : index
    %344 = vector.load %arg5[%c1_182, %c1_183, %c2_184, %c0_185] : memref<3x3x18x16xf32, #tpu.memory_space<vmem>>, vector<1x1x16x16xf32>
    %345 = vector.shape_cast %344 : vector<1x1x16x16xf32> to vector<16x16xf32>
    %346 = vector.broadcast %16 : f32 to vector<16x16xf32>
    %347 = arith.mulf %346, %345 : vector<16x16xf32>
    %348 = arith.addf %337, %347 : vector<16x16xf32>
    %349 = vector.broadcast %43 : f32 to vector<16x16xf32>
    %350 = arith.mulf %349, %345 : vector<16x16xf32>
    %351 = arith.addf %340, %350 : vector<16x16xf32>
    %352 = vector.broadcast %70 : f32 to vector<16x16xf32>
    %353 = arith.mulf %352, %345 : vector<16x16xf32>
    %354 = arith.addf %343, %353 : vector<16x16xf32>
    %c1_186 = arith.constant 1 : index
    %c2_187 = arith.constant 2 : index
    %c0_188 = arith.constant 0 : index
    %c0_189 = arith.constant 0 : index
    %355 = vector.load %arg5[%c1_186, %c2_187, %c0_188, %c0_189] : memref<3x3x18x16xf32, #tpu.memory_space<vmem>>, vector<1x1x16x16xf32>
    %356 = vector.shape_cast %355 : vector<1x1x16x16xf32> to vector<16x16xf32>
    %357 = vector.broadcast %11 : f32 to vector<16x16xf32>
    %358 = arith.mulf %357, %356 : vector<16x16xf32>
    %359 = arith.addf %348, %358 : vector<16x16xf32>
    %360 = vector.broadcast %38 : f32 to vector<16x16xf32>
    %361 = arith.mulf %360, %356 : vector<16x16xf32>
    %362 = arith.addf %351, %361 : vector<16x16xf32>
    %363 = vector.broadcast %65 : f32 to vector<16x16xf32>
    %364 = arith.mulf %363, %356 : vector<16x16xf32>
    %365 = arith.addf %354, %364 : vector<16x16xf32>
    %c1_190 = arith.constant 1 : index
    %c2_191 = arith.constant 2 : index
    %c1_192 = arith.constant 1 : index
    %c0_193 = arith.constant 0 : index
    %366 = vector.load %arg5[%c1_190, %c2_191, %c1_192, %c0_193] : memref<3x3x18x16xf32, #tpu.memory_space<vmem>>, vector<1x1x16x16xf32>
    %367 = vector.shape_cast %366 : vector<1x1x16x16xf32> to vector<16x16xf32>
    %368 = vector.broadcast %14 : f32 to vector<16x16xf32>
    %369 = arith.mulf %368, %367 : vector<16x16xf32>
    %370 = arith.addf %359, %369 : vector<16x16xf32>
    %371 = vector.broadcast %41 : f32 to vector<16x16xf32>
    %372 = arith.mulf %371, %367 : vector<16x16xf32>
    %373 = arith.addf %362, %372 : vector<16x16xf32>
    %374 = vector.broadcast %68 : f32 to vector<16x16xf32>
    %375 = arith.mulf %374, %367 : vector<16x16xf32>
    %376 = arith.addf %365, %375 : vector<16x16xf32>
    %c1_194 = arith.constant 1 : index
    %c2_195 = arith.constant 2 : index
    %c2_196 = arith.constant 2 : index
    %c0_197 = arith.constant 0 : index
    %377 = vector.load %arg5[%c1_194, %c2_195, %c2_196, %c0_197] : memref<3x3x18x16xf32, #tpu.memory_space<vmem>>, vector<1x1x16x16xf32>
    %378 = vector.shape_cast %377 : vector<1x1x16x16xf32> to vector<16x16xf32>
    %379 = vector.broadcast %17 : f32 to vector<16x16xf32>
    %380 = arith.mulf %379, %378 : vector<16x16xf32>
    %381 = arith.addf %370, %380 : vector<16x16xf32>
    %382 = vector.broadcast %44 : f32 to vector<16x16xf32>
    %383 = arith.mulf %382, %378 : vector<16x16xf32>
    %384 = arith.addf %373, %383 : vector<16x16xf32>
    %385 = vector.broadcast %71 : f32 to vector<16x16xf32>
    %386 = arith.mulf %385, %378 : vector<16x16xf32>
    %387 = arith.addf %376, %386 : vector<16x16xf32>
    %c2_198 = arith.constant 2 : index
    %c0_199 = arith.constant 0 : index
    %c0_200 = arith.constant 0 : index
    %c0_201 = arith.constant 0 : index
    %388 = vector.load %arg5[%c2_198, %c0_199, %c0_200, %c0_201] : memref<3x3x18x16xf32, #tpu.memory_space<vmem>>, vector<1x1x16x16xf32>
    %389 = vector.shape_cast %388 : vector<1x1x16x16xf32> to vector<16x16xf32>
    %390 = vector.broadcast %18 : f32 to vector<16x16xf32>
    %391 = arith.mulf %390, %389 : vector<16x16xf32>
    %392 = arith.addf %381, %391 : vector<16x16xf32>
    %393 = vector.broadcast %45 : f32 to vector<16x16xf32>
    %394 = arith.mulf %393, %389 : vector<16x16xf32>
    %395 = arith.addf %384, %394 : vector<16x16xf32>
    %396 = vector.broadcast %72 : f32 to vector<16x16xf32>
    %397 = arith.mulf %396, %389 : vector<16x16xf32>
    %398 = arith.addf %387, %397 : vector<16x16xf32>
    %c2_202 = arith.constant 2 : index
    %c0_203 = arith.constant 0 : index
    %c1_204 = arith.constant 1 : index
    %c0_205 = arith.constant 0 : index
    %399 = vector.load %arg5[%c2_202, %c0_203, %c1_204, %c0_205] : memref<3x3x18x16xf32, #tpu.memory_space<vmem>>, vector<1x1x16x16xf32>
    %400 = vector.shape_cast %399 : vector<1x1x16x16xf32> to vector<16x16xf32>
    %401 = vector.broadcast %21 : f32 to vector<16x16xf32>
    %402 = arith.mulf %401, %400 : vector<16x16xf32>
    %403 = arith.addf %392, %402 : vector<16x16xf32>
    %404 = vector.broadcast %48 : f32 to vector<16x16xf32>
    %405 = arith.mulf %404, %400 : vector<16x16xf32>
    %406 = arith.addf %395, %405 : vector<16x16xf32>
    %407 = vector.broadcast %75 : f32 to vector<16x16xf32>
    %408 = arith.mulf %407, %400 : vector<16x16xf32>
    %409 = arith.addf %398, %408 : vector<16x16xf32>
    %c2_206 = arith.constant 2 : index
    %c0_207 = arith.constant 0 : index
    %c2_208 = arith.constant 2 : index
    %c0_209 = arith.constant 0 : index
    %410 = vector.load %arg5[%c2_206, %c0_207, %c2_208, %c0_209] : memref<3x3x18x16xf32, #tpu.memory_space<vmem>>, vector<1x1x16x16xf32>
    %411 = vector.shape_cast %410 : vector<1x1x16x16xf32> to vector<16x16xf32>
    %412 = vector.broadcast %24 : f32 to vector<16x16xf32>
    %413 = arith.mulf %412, %411 : vector<16x16xf32>
    %414 = arith.addf %403, %413 : vector<16x16xf32>
    %415 = vector.broadcast %51 : f32 to vector<16x16xf32>
    %416 = arith.mulf %415, %411 : vector<16x16xf32>
    %417 = arith.addf %406, %416 : vector<16x16xf32>
    %418 = vector.broadcast %78 : f32 to vector<16x16xf32>
    %419 = arith.mulf %418, %411 : vector<16x16xf32>
    %420 = arith.addf %409, %419 : vector<16x16xf32>
    %c2_210 = arith.constant 2 : index
    %c1_211 = arith.constant 1 : index
    %c0_212 = arith.constant 0 : index
    %c0_213 = arith.constant 0 : index
    %421 = vector.load %arg5[%c2_210, %c1_211, %c0_212, %c0_213] : memref<3x3x18x16xf32, #tpu.memory_space<vmem>>, vector<1x1x16x16xf32>
    %422 = vector.shape_cast %421 : vector<1x1x16x16xf32> to vector<16x16xf32>
    %423 = vector.broadcast %19 : f32 to vector<16x16xf32>
    %424 = arith.mulf %423, %422 : vector<16x16xf32>
    %425 = arith.addf %414, %424 : vector<16x16xf32>
    %426 = vector.broadcast %46 : f32 to vector<16x16xf32>
    %427 = arith.mulf %426, %422 : vector<16x16xf32>
    %428 = arith.addf %417, %427 : vector<16x16xf32>
    %429 = vector.broadcast %73 : f32 to vector<16x16xf32>
    %430 = arith.mulf %429, %422 : vector<16x16xf32>
    %431 = arith.addf %420, %430 : vector<16x16xf32>
    %c2_214 = arith.constant 2 : index
    %c1_215 = arith.constant 1 : index
    %c1_216 = arith.constant 1 : index
    %c0_217 = arith.constant 0 : index
    %432 = vector.load %arg5[%c2_214, %c1_215, %c1_216, %c0_217] : memref<3x3x18x16xf32, #tpu.memory_space<vmem>>, vector<1x1x16x16xf32>
    %433 = vector.shape_cast %432 : vector<1x1x16x16xf32> to vector<16x16xf32>
    %434 = vector.broadcast %22 : f32 to vector<16x16xf32>
    %435 = arith.mulf %434, %433 : vector<16x16xf32>
    %436 = arith.addf %425, %435 : vector<16x16xf32>
    %437 = vector.broadcast %49 : f32 to vector<16x16xf32>
    %438 = arith.mulf %437, %433 : vector<16x16xf32>
    %439 = arith.addf %428, %438 : vector<16x16xf32>
    %440 = vector.broadcast %76 : f32 to vector<16x16xf32>
    %441 = arith.mulf %440, %433 : vector<16x16xf32>
    %442 = arith.addf %431, %441 : vector<16x16xf32>
    %c2_218 = arith.constant 2 : index
    %c1_219 = arith.constant 1 : index
    %c2_220 = arith.constant 2 : index
    %c0_221 = arith.constant 0 : index
    %443 = vector.load %arg5[%c2_218, %c1_219, %c2_220, %c0_221] : memref<3x3x18x16xf32, #tpu.memory_space<vmem>>, vector<1x1x16x16xf32>
    %444 = vector.shape_cast %443 : vector<1x1x16x16xf32> to vector<16x16xf32>
    %445 = vector.broadcast %25 : f32 to vector<16x16xf32>
    %446 = arith.mulf %445, %444 : vector<16x16xf32>
    %447 = arith.addf %436, %446 : vector<16x16xf32>
    %448 = vector.broadcast %52 : f32 to vector<16x16xf32>
    %449 = arith.mulf %448, %444 : vector<16x16xf32>
    %450 = arith.addf %439, %449 : vector<16x16xf32>
    %451 = vector.broadcast %79 : f32 to vector<16x16xf32>
    %452 = arith.mulf %451, %444 : vector<16x16xf32>
    %453 = arith.addf %442, %452 : vector<16x16xf32>
    %c2_222 = arith.constant 2 : index
    %c2_223 = arith.constant 2 : index
    %c0_224 = arith.constant 0 : index
    %c0_225 = arith.constant 0 : index
    %454 = vector.load %arg5[%c2_222, %c2_223, %c0_224, %c0_225] : memref<3x3x18x16xf32, #tpu.memory_space<vmem>>, vector<1x1x16x16xf32>
    %455 = vector.shape_cast %454 : vector<1x1x16x16xf32> to vector<16x16xf32>
    %456 = vector.broadcast %20 : f32 to vector<16x16xf32>
    %457 = arith.mulf %456, %455 : vector<16x16xf32>
    %458 = arith.addf %447, %457 : vector<16x16xf32>
    %459 = vector.broadcast %47 : f32 to vector<16x16xf32>
    %460 = arith.mulf %459, %455 : vector<16x16xf32>
    %461 = arith.addf %450, %460 : vector<16x16xf32>
    %462 = vector.broadcast %74 : f32 to vector<16x16xf32>
    %463 = arith.mulf %462, %455 : vector<16x16xf32>
    %464 = arith.addf %453, %463 : vector<16x16xf32>
    %c2_226 = arith.constant 2 : index
    %c2_227 = arith.constant 2 : index
    %c1_228 = arith.constant 1 : index
    %c0_229 = arith.constant 0 : index
    %465 = vector.load %arg5[%c2_226, %c2_227, %c1_228, %c0_229] : memref<3x3x18x16xf32, #tpu.memory_space<vmem>>, vector<1x1x16x16xf32>
    %466 = vector.shape_cast %465 : vector<1x1x16x16xf32> to vector<16x16xf32>
    %467 = vector.broadcast %23 : f32 to vector<16x16xf32>
    %468 = arith.mulf %467, %466 : vector<16x16xf32>
    %469 = arith.addf %458, %468 : vector<16x16xf32>
    %470 = vector.broadcast %50 : f32 to vector<16x16xf32>
    %471 = arith.mulf %470, %466 : vector<16x16xf32>
    %472 = arith.addf %461, %471 : vector<16x16xf32>
    %473 = vector.broadcast %77 : f32 to vector<16x16xf32>
    %474 = arith.mulf %473, %466 : vector<16x16xf32>
    %475 = arith.addf %464, %474 : vector<16x16xf32>
    %c2_230 = arith.constant 2 : index
    %c2_231 = arith.constant 2 : index
    %c2_232 = arith.constant 2 : index
    %c0_233 = arith.constant 0 : index
    %476 = vector.load %arg5[%c2_230, %c2_231, %c2_232, %c0_233] : memref<3x3x18x16xf32, #tpu.memory_space<vmem>>, vector<1x1x16x16xf32>
    %477 = vector.shape_cast %476 : vector<1x1x16x16xf32> to vector<16x16xf32>
    %478 = vector.broadcast %26 : f32 to vector<16x16xf32>
    %479 = arith.mulf %478, %477 : vector<16x16xf32>
    %480 = arith.addf %469, %479 : vector<16x16xf32>
    %481 = vector.broadcast %53 : f32 to vector<16x16xf32>
    %482 = arith.mulf %481, %477 : vector<16x16xf32>
    %483 = arith.addf %472, %482 : vector<16x16xf32>
    %484 = vector.broadcast %80 : f32 to vector<16x16xf32>
    %485 = arith.mulf %484, %477 : vector<16x16xf32>
    %486 = arith.addf %475, %485 : vector<16x16xf32>
    %c0_234 = arith.constant 0 : index
    %c0_235 = arith.constant 0 : index
    %c0_236 = arith.constant 0 : index
    %c0_237 = arith.constant 0 : index
    %487 = vector.load %arg4[%c0_234, %c0_235, %c0_236, %c0_237] : memref<1x3x16x16xf32, #tpu.memory_space<vmem>>, vector<1x1x16x16xf32>
    %488 = vector.shape_cast %487 : vector<1x1x16x16xf32> to vector<16x16xf32>
    %489 = vector.shape_cast %480 : vector<16x16xf32> to vector<1x1x16x16xf32>
    tpu.vector_store %arg4[%c0_234, %c0_235, %c0_236, %c0_237], %489 {strides = array<i32>} : memref<1x3x16x16xf32, #tpu.memory_space<vmem>>, vector<1x1x16x16xf32>,
    %c0_238 = arith.constant 0 : index
    %c1_239 = arith.constant 1 : index
    %c0_240 = arith.constant 0 : index
    %c0_241 = arith.constant 0 : index
    %490 = vector.load %arg4[%c0_238, %c1_239, %c0_240, %c0_241] : memref<1x3x16x16xf32, #tpu.memory_space<vmem>>, vector<1x1x16x16xf32>
    %491 = vector.shape_cast %490 : vector<1x1x16x16xf32> to vector<16x16xf32>
    %492 = vector.shape_cast %483 : vector<16x16xf32> to vector<1x1x16x16xf32>
    tpu.vector_store %arg4[%c0_238, %c1_239, %c0_240, %c0_241], %492 {strides = array<i32>} : memref<1x3x16x16xf32, #tpu.memory_space<vmem>>, vector<1x1x16x16xf32>,
    %c0_242 = arith.constant 0 : index
    %c2_243 = arith.constant 2 : index
    %c0_244 = arith.constant 0 : index
    %c0_245 = arith.constant 0 : index
    %493 = vector.load %arg4[%c0_242, %c2_243, %c0_244, %c0_245] : memref<1x3x16x16xf32, #tpu.memory_space<vmem>>, vector<1x1x16x16xf32>
    %494 = vector.shape_cast %493 : vector<1x1x16x16xf32> to vector<16x16xf32>
    %495 = vector.shape_cast %486 : vector<16x16xf32> to vector<1x1x16x16xf32>
    tpu.vector_store %arg4[%c0_242, %c2_243, %c0_244, %c0_245], %495 {strides = array<i32>} : memref<1x3x16x16xf32, #tpu.memory_space<vmem>>, vector<1x1x16x16xf32>,
    return
  }
  func.func @transform_0(%arg0: i32) -> i32 {
    %c0_i32 = arith.constant 0 : i32
    %c0_i32_0 = arith.constant 0 : i32
    return %c0_i32 : i32
  }
  func.func @transform_1(%arg0: i32) -> i32 {
    %c0_i32 = arith.constant 0 : i32
    %c0_i32_0 = arith.constant 0 : i32
    return %c0_i32 : i32
  }
  func.func @transform_2(%arg0: i32) -> (i32, i32, i32, i32) {
    %c0_i32 = arith.constant 0 : i32
    %c0_i32_0 = arith.constant 0 : i32
    %c0_i32_1 = arith.constant 0 : i32
    %c0_i32_2 = arith.constant 0 : i32
    return %arg0, %c0_i32, %c0_i32_0, %c0_i32_1 : i32, i32, i32, i32
  }
  func.func @transform_3(%arg0: i32) -> (i32, i32, i32, i32) {
    %c0_i32 = arith.constant 0 : i32
    %c0_i32_0 = arith.constant 0 : i32
    %c0_i32_1 = arith.constant 0 : i32
    %c0_i32_2 = arith.constant 0 : i32
    return %arg0, %c0_i32, %c0_i32_0, %c0_i32_1 : i32, i32, i32, i32
  }
}

</mosaic_0001>

<llo_original>
// kernel: tpu_custom_call.1
$region0: #{tpu_custom_call.1}
  #allocation0 [shape = 'u32[]', space=smem, size = 0x4, offset = 0x4, fixed_abs, tag = 'smem constant byte address 0x4 - core index']
  #allocation1 [shape = 'u32[144,128]{1,0:T(1,128)}', space=vmem, size = 0x12000, scoped, tag = 'internal scratch']
  #allocation2 [shape = 'f32[3,3,18,16]{3,2,1,0:T(8,128)}', space=vmem, size = 0x1b000, scoped, tag = 'scratch operand']
  %s0 = inlined_call_operand.hbm [shape: f32[81], index: 0, kind: input, shape index: {}]
  %s1 = inlined_call_operand.vmem [shape: f32[3], index: 1, kind: input, shape index: {}]
  %s2 = inlined_call_operand.hbm [shape: f32[2,3,16,16], index: 2, kind: input, shape index: {}]
  %s3 = inlined_call_operand.hbm [shape: f32[2,3,16,16], index: 3, kind: output, shape index: {}]
  %s4 = sld [smem:[#allocation0]]
  $region57: #{tpu_custom_call.1} parent=0
    _
  %s6 = ssub.s32 1, %s4
  %s7 = scalar_select 0, %s6, %s4
  $region1: #{tpu_custom_call.1} parent=0
    #allocation3 [shape = 'u8[512]{0}', space=smem, size = 0x200, scoped, tag = 'input window, operand 0, single buffered']
    #allocation4 [shape = 's32[2]{0}', space=sflag, size = 0x8, scoped, tag = 'scoped memory for tpu_custom_call.1']
    #allocation5 [shape = 's32[2]{0}', space=sflag, size = 0x8, scoped, tag = 'scoped memory for tpu_custom_call.1']
    #allocation6 [shape = 's32[2]{0}', space=sflag, size = 0x8, scoped, tag = 'scoped memory for tpu_custom_call.1']
    #allocation7 [shape = 's32[2]{0}', space=sflag, size = 0x8, scoped, tag = 'scoped memory for tpu_custom_call.1']
    #allocation8 [shape = 'u8[512]{0}', space=smem, size = 0x200, scoped, tag = 'input window, operand 1, single buffered']
    #allocation9 [shape = 'u8[49152]{0}', space=vmem, size = 0xc000, scoped, tag = 'input window, operand 2']
    #allocation10 [shape = 'u8[49152]{0}', space=vmem, size = 0xc000, scoped, tag = 'output window, operand 0']
    %8 = vsyncpa [#allocation6], 0
    %9 = vsyncpa [#allocation7], 0
    %10 = vsyncpa [#allocation4], 0
    %s11 = scalar_lea.sflag [#allocation4], 1
    %12 = vsyncpa %s11, 0
    %13 = vsyncpa [#allocation5], 0
    %s14 = scalar_lea.sflag [#allocation5], 1
    %15 = vsyncpa %s14, 0
    loop: start=0, step=1, limit=4
    $region2: #{tpu_custom_call.1} parent=1 // loop_pre_header
      _
    $region3: #{tpu_custom_call.1} parent=1 // loop_header
      %s17 = sphi 0, %s21
      %p18 = scmp.ge.s32.totalorder %s17, 4
      %s25 = sphi 0, %s25
      %s27 = sphi 0, %s25
      %s28 = sphi 0, %s27
      %s42 = sphi 0, %s28
      %s46 = sphi 0, %s46
      %s48 = sphi 0, %s46
      %s49 = sphi 0, %s48
      %s63 = sphi 0, %s49
      %s69 = sphi 0, %s71
      %s72 = sphi 0, %s69
      %s73 = sphi 0, %s72
      %s89 = sphi 0, %s73
      %s95 = sphi 0, %s97
      %s98 = sphi 0, %s95
      %s99 = sphi 0, %s98
      %s115 = sphi 0, %s99
    $region4: #{tpu_custom_call.1} parent=1 // loop_header_branch
      %20 = sbr.rel (%p18) target = $region8
    $region5: #{tpu_custom_call.1} parent=1 // loop_body
      %s22 = ssub.s32 %s17, 1
      %s23 = ssub.s32 %s17, 2
      %s24 = sadd.s32 %s17, 1
      %s26 = sadd.s32 %s25, 1
      %p29 = scmp.eq.s32.totalorder %s17, 1
      %p30 = scmp.ne.s32.totalorder %s25, %s27
      %p31 = scmp.eq.s32.totalorder %s17, 0
      %p32 = por %p30, %p31
      %p33 = scmp.ne.s32.totalorder %s25, %s27
      %p34 = scmp.eq.s32.totalorder %s22, 1
      %p35 = por %p33, %p34
      %p36 = scmp.ne.s32.totalorder %s27, %s28
      %p37 = scmp.eq.s32.totalorder %s22, 0
      %p38 = por %p36, %p37
      %p39 = scmp.ne.s32.totalorder %s27, %s28
      %p40 = scmp.eq.s32.totalorder %s23, 1
      %p41 = por %p39, %p40
      %p43 = scmp.ne.s32.totalorder %s28, %s42
      %p44 = scmp.eq.s32.totalorder %s23, 0
      %p45 = por %p43, %p44
      %s47 = sadd.s32 %s46, 1
      %p50 = scmp.eq.s32.totalorder %s17, 1
      %p51 = scmp.ne.s32.totalorder %s46, %s48
      %p52 = scmp.eq.s32.totalorder %s17, 0
      %p53 = por %p51, %p52
      %p54 = scmp.ne.s32.totalorder %s46, %s48
      %p55 = scmp.eq.s32.totalorder %s22, 1
      %p56 = por %p54, %p55
      %p57 = scmp.ne.s32.totalorder %s48, %s49
      %p58 = scmp.eq.s32.totalorder %s22, 0
      %p59 = por %p57, %p58
      %p60 = scmp.ne.s32.totalorder %s48, %s49
      %p61 = scmp.eq.s32.totalorder %s23, 1
      %p62 = por %p60, %p61
      %p64 = scmp.ne.s32.totalorder %s49, %s63
      %p65 = scmp.eq.s32.totalorder %s23, 0
      %p66 = por %p64, %p65
      %s67 = ssub.s32 %s17, %s24
      %p68 = scmp.eq.s32.totalorder %s67, 0
      %s70 = sadd.s32 %s69, 1
      %s71 = scalar_select %p68, %s69, %s70
      %p74 = pneg %p68
      %p75 = scmp.eq.s32.totalorder %s17, 1
      %p76 = por %p74, %p75
      %p77 = scmp.ne.s32.totalorder %s69, %s72
      %p78 = scmp.eq.s32.totalorder %s17, 0
      %p79 = por %p77, %p78
      %p80 = scmp.ne.s32.totalorder %s69, %s72
      %p81 = scmp.eq.s32.totalorder %s22, 1
      %p82 = por %p80, %p81
      %p83 = scmp.ne.s32.totalorder %s72, %s73
      %p84 = scmp.eq.s32.totalorder %s22, 0
      %p85 = por %p83, %p84
      %p86 = scmp.ne.s32.totalorder %s72, %s73
      %p87 = scmp.eq.s32.totalorder %s23, 1
      %p88 = por %p86, %p87
      %p90 = scmp.ne.s32.totalorder %s73, %s89
      %p91 = scmp.eq.s32.totalorder %s23, 0
      %p92 = por %p90, %p91
      %s93 = ssub.s32 %s17, %s24
      %p94 = scmp.eq.s32.totalorder %s93, 0
      %s96 = sadd.s32 %s95, 1
      %s97 = scalar_select %p94, %s95, %s96
      %p100 = pneg %p94
      %p101 = scmp.eq.s32.totalorder %s17, 1
      %p102 = por %p100, %p101
      %p103 = scmp.ne.s32.totalorder %s95, %s98
      %p104 = scmp.eq.s32.totalorder %s17, 0
      %p105 = por %p103, %p104
      %p106 = scmp.ne.s32.totalorder %s95, %s98
      %p107 = scmp.eq.s32.totalorder %s22, 1
      %p108 = por %p106, %p107
      %p109 = scmp.ne.s32.totalorder %s98, %s99
      %p110 = scmp.eq.s32.totalorder %s22, 0
      %p111 = por %p109, %p110
      %p112 = scmp.ne.s32.totalorder %s98, %s99
      %p113 = scmp.eq.s32.totalorder %s23, 1
      %p114 = por %p112, %p113
      %p116 = scmp.ne.s32.totalorder %s99, %s115
      %p117 = scmp.eq.s32.totalorder %s23, 0
      %p118 = por %p116, %p117
      %p119 = scmp.le.s32.totalorder 1, %s17
      %p120 = scmp.lt.s32.totalorder %s17, 3
      %p121 = pnand %p119, %p120
      %p122 = pneg %p121
      // Predicated region
      $region9: #{tpu_custom_call.1} parent=5 // pred_check
        _
      $region10: #{tpu_custom_call.1} parent=5 // pred_check_branch
        %124 = sbr.rel (%p121) target = $region12
      $region11: #{tpu_custom_call.1} parent=5 // pred_region
        %s125 = ssub.s32 %s17, 1
        // Predicated region
        $region13: #{tpu_custom_call.1} parent=11 // pred_check
          %p126 = pneg %p38
        $region14: #{tpu_custom_call.1} parent=11 // pred_check_branch
          %128 = sbr.rel (%p126) target = $region16
        $region15: #{tpu_custom_call.1} parent=11 // pred_region
          %s130 = ssub.s32 16, 16
          %131 = vsyncadd [#allocation6], %s130
          %134 = dma.hbm_to_smem %s0, 16, [#allocation3], [#allocation6]
        $region16: #{tpu_custom_call.1} parent=11 // pred_fallthru
          _
        // Predicated region
        $region17: #{tpu_custom_call.1} parent=11 // pred_check
          %p135 = pneg %p59
        $region18: #{tpu_custom_call.1} parent=11 // pred_check_branch
          %137 = sbr.rel (%p135) target = $region20
        $region19: #{tpu_custom_call.1} parent=11 // pred_region
          %s139 = ssub.s32 16, 16
          %140 = vsyncadd [#allocation7], %s139
          %s142 = sshll.u32 %s1, 4
          %s143 = int_to_ptr.vmem [resolvable:$true] %s142
          %145 = dma.vmem_to_smem %s143, 16, [#allocation8], [#allocation7]
        $region20: #{tpu_custom_call.1} parent=11 // pred_fallthru
          _
      $region12: #{tpu_custom_call.1} parent=5 // pred_fallthru
        _
      %p146 = scmp.lt.s32.totalorder %s17, 2
      // Predicated region
      $region21: #{tpu_custom_call.1} parent=5 // pred_check
        %p147 = pneg %p146
      $region22: #{tpu_custom_call.1} parent=5 // pred_check_branch
        %149 = sbr.rel (%p147) target = $region24
      $region23: #{tpu_custom_call.1} parent=5 // pred_region
        // Predicated region
        $region25: #{tpu_custom_call.1} parent=23 // pred_check
          %p150 = pneg %p79
        $region26: #{tpu_custom_call.1} parent=23 // pred_check_branch
          %152 = sbr.rel (%p150) target = $region28
        $region27: #{tpu_custom_call.1} parent=23 // pred_region
          %s153 = sand.u32 %s69, 1
          %s154 = scalar_lea.sflag [#allocation4], %s153
          %s155 = sand.u32 %s69, 1
          %s156 = smul.addr %s155, 48
          %s157 = scalar_lea.vmem [#allocation9], %s156
          %s159 = ssub.s32 768, 768
          %160 = vsyncadd %s154, %s159
          %s161 = smul.addr %s17, 6
          %s162 = smul.addr %s161, 128
          %s163 = scalar_lea.hbm %s2, %s162
          %s164 = sshll.u32 %s157, 4
          %s165 = int_to_ptr.vmem [resolvable:$true] %s164
          %170 = dma.hbm_to_vmem [thread:$0]  %s163, 768, %s165, %s154, 128, 128, 8
        $region28: #{tpu_custom_call.1} parent=23 // pred_fallthru
          _
      $region24: #{tpu_custom_call.1} parent=5 // pred_fallthru
        _
      %p171 = scmp.le.s32.totalorder 1, %s17
      %p172 = scmp.lt.s32.totalorder %s17, 3
      %p173 = pnand %p171, %p172
      %p174 = pneg %p173
      // Predicated region
      $region29: #{tpu_custom_call.1} parent=5 // pred_check
        _
      $region30: #{tpu_custom_call.1} parent=5 // pred_check_branch
        %176 = sbr.rel (%p173) target = $region32
      $region31: #{tpu_custom_call.1} parent=5 // pred_region
        %s177 = ssub.s32 %s17, 1
        // Predicated region
        $region33: #{tpu_custom_call.1} parent=31 // pred_check
          %p178 = pneg %p38
        $region34: #{tpu_custom_call.1} parent=31 // pred_check_branch
          %180 = sbr.rel (%p178) target = $region36
        $region35: #{tpu_custom_call.1} parent=31 // pred_region
          %181 = dma.done [#allocation6], 16
        $region36: #{tpu_custom_call.1} parent=31 // pred_fallthru
          _
        // Predicated region
        $region37: #{tpu_custom_call.1} parent=31 // pred_check
          %p182 = pneg %p59
        $region38: #{tpu_custom_call.1} parent=31 // pred_check_branch
          %184 = sbr.rel (%p182) target = $region40
        $region39: #{tpu_custom_call.1} parent=31 // pred_region
          %185 = dma.done [#allocation7], 16
        $region40: #{tpu_custom_call.1} parent=31 // pred_fallthru
          _
        %s186 = sand.u32 %s72, 1
        %s187 = scalar_lea.sflag [#allocation4], %s186
        %s188 = sand.u32 %s72, 1
        %s189 = smul.addr %s188, 48
        %s190 = scalar_lea.vmem [#allocation9], %s189
        // Predicated region
        $region41: #{tpu_custom_call.1} parent=31 // pred_check
          %p191 = pneg %p85
        $region42: #{tpu_custom_call.1} parent=31 // pred_check_branch
          %193 = sbr.rel (%p191) target = $region44
        $region43: #{tpu_custom_call.1} parent=31 // pred_region
          %194 = dma.done %s187, 768
        $region44: #{tpu_custom_call.1} parent=31 // pred_fallthru
          _
        %195 = sfence
        %p196 = pneg %p38
        %p197 = pneg %p35
        %p198 = pneg %p59
        %p199 = pneg %p56
        %s200 = sand.u32 %s72, 1
        %s201 = scalar_lea.sflag [#allocation4], %s200
        %s202 = sand.u32 %s72, 1
        %s203 = smul.addr %s202, 48
        %s204 = scalar_lea.vmem [#allocation9], %s203
        %p205 = pneg %p85
        %p206 = pneg %p82
        %p207 = pneg %p111
        %p208 = pneg %p108
        %s209 = sand.u32 %s98, 1
        %s210 = scalar_lea.sflag [#allocation5], %s209
        %s211 = sand.u32 %s98, 1
        %s212 = smul.addr %s211, 48
        %s213 = scalar_lea.vmem [#allocation10], %s212
        %s214 = sld [smem:[#allocation3]]
        %s215 = sld [smem:[#allocation3 + $0x1]]
        %s216 = sld [smem:[#allocation3 + $0x2]]
        %s217 = sld [smem:[#allocation3 + $0x3]]
        %s218 = sld [smem:[#allocation3 + $0x4]]
        %s219 = sld [smem:[#allocation3 + $0x5]]
        %s220 = sld [smem:[#allocation3 + $0x6]]
        %s221 = sld [smem:[#allocation3 + $0x7]]
        %s222 = sld [smem:[#allocation3 + $0x8]]
        %s223 = sld [smem:[#allocation3 + $0x9]]
        %s224 = sld [smem:[#allocation3 + $0xa]]
        %s225 = sld [smem:[#allocation3 + $0xb]]
        %s226 = sld [smem:[#allocation3 + $0xc]]
        %s227 = sld [smem:[#allocation3 + $0xd]]
        %s228 = sld [smem:[#allocation3 + $0xe]]
        %s229 = sld [smem:[#allocation3 + $0xf]]
        %s230 = sld [smem:[#allocation3 + $0x10]]
        %s231 = sld [smem:[#allocation3 + $0x11]]
        %s232 = sld [smem:[#allocation3 + $0x12]]
        %s233 = sld [smem:[#allocation3 + $0x13]]
        %s234 = sld [smem:[#allocation3 + $0x14]]
        %s235 = sld [smem:[#allocation3 + $0x15]]
        %s236 = sld [smem:[#allocation3 + $0x16]]
        %s237 = sld [smem:[#allocation3 + $0x17]]
        %s238 = sld [smem:[#allocation3 + $0x18]]
        %s239 = sld [smem:[#allocation3 + $0x19]]
        %s240 = sld [smem:[#allocation3 + $0x1a]]
        %s241 = sld [smem:[#allocation3 + $0x1b]]
        %s242 = sld [smem:[#allocation3 + $0x1c]]
        %s243 = sld [smem:[#allocation3 + $0x1d]]
        %s244 = sld [smem:[#allocation3 + $0x1e]]
        %s245 = sld [smem:[#allocation3 + $0x1f]]
        %s246 = sld [smem:[#allocation3 + $0x20]]
        %s247 = sld [smem:[#allocation3 + $0x21]]
        %s248 = sld [smem:[#allocation3 + $0x22]]
        %s249 = sld [smem:[#allocation3 + $0x23]]
        %s250 = sld [smem:[#allocation3 + $0x24]]
        %s251 = sld [smem:[#allocation3 + $0x25]]
        %s252 = sld [smem:[#allocation3 + $0x26]]
        %s253 = sld [smem:[#allocation3 + $0x27]]
        %s254 = sld [smem:[#allocation3 + $0x28]]
        %s255 = sld [smem:[#allocation3 + $0x29]]
        %s256 = sld [smem:[#allocation3 + $0x2a]]
        %s257 = sld [smem:[#allocation3 + $0x2b]]
        %s258 = sld [smem:[#allocation3 + $0x2c]]
        %s259 = sld [smem:[#allocation3 + $0x2d]]
        %s260 = sld [smem:[#allocation3 + $0x2e]]
        %s261 = sld [smem:[#allocation3 + $0x2f]]
        %s262 = sld [smem:[#allocation3 + $0x30]]
        %s263 = sld [smem:[#allocation3 + $0x31]]
        %s264 = sld [smem:[#allocation3 + $0x32]]
        %s265 = sld [smem:[#allocation3 + $0x33]]
        %s266 = sld [smem:[#allocation3 + $0x34]]
        %s267 = sld [smem:[#allocation3 + $0x35]]
        %s268 = sld [smem:[#allocation3 + $0x36]]
        %s269 = sld [smem:[#allocation3 + $0x37]]
        %s270 = sld [smem:[#allocation3 + $0x38]]
        %s271 = sld [smem:[#allocation3 + $0x39]]
        %s272 = sld [smem:[#allocation3 + $0x3a]]
        %s273 = sld [smem:[#allocation3 + $0x3b]]
        %s274 = sld [smem:[#allocation3 + $0x3c]]
        %s275 = sld [smem:[#allocation3 + $0x3d]]
        %s276 = sld [smem:[#allocation3 + $0x3e]]
        %s277 = sld [smem:[#allocation3 + $0x3f]]
        %s278 = sld [smem:[#allocation3 + $0x40]]
        %s279 = sld [smem:[#allocation3 + $0x41]]
        %s280 = sld [smem:[#allocation3 + $0x42]]
        %s281 = sld [smem:[#allocation3 + $0x43]]
        %s282 = sld [smem:[#allocation3 + $0x44]]
        %s283 = sld [smem:[#allocation3 + $0x45]]
        %s284 = sld [smem:[#allocation3 + $0x46]]
        %s285 = sld [smem:[#allocation3 + $0x47]]
        %s286 = sld [smem:[#allocation3 + $0x48]]
        %s287 = sld [smem:[#allocation3 + $0x49]]
        %s288 = sld [smem:[#allocation3 + $0x4a]]
        %s289 = sld [smem:[#allocation3 + $0x4b]]
        %s290 = sld [smem:[#allocation3 + $0x4c]]
        %s291 = sld [smem:[#allocation3 + $0x4d]]
        %s292 = sld [smem:[#allocation3 + $0x4e]]
        %s293 = sld [smem:[#allocation3 + $0x4f]]
        %s294 = sld [smem:[#allocation3 + $0x50]]
        %s295 = sld [smem:[#allocation8]]
        %s296 = sld [smem:[#allocation8 + $0x1]]
        %s297 = sld [smem:[#allocation8 + $0x2]]
        %vm298 = vcmask 122880
        %299 = vst.msk [vmem:[#allocation2] sm:$0x1] %vm298, 0.0
        %300 = vst.msk [vmem:[#allocation2 + $0x11] sm:$0x1] %vm298, 0.0
        %s301 = scalar_lea.vmem [#allocation2], 24
        %302 = vst.msk [vmem:[%s301] sm:$0x1] %vm298, 0.0
        %303 = vst.msk [vmem:[%s301 + $0x11] sm:$0x1] %vm298, 0.0
        %s304 = scalar_lea.vmem [#allocation2], 48
        %305 = vst.msk [vmem:[%s304] sm:$0x1] %vm298, 0.0
        %306 = vst.msk [vmem:[%s304 + $0x11] sm:$0x1] %vm298, 0.0
        %s307 = scalar_lea.vmem [#allocation2], 72
        %308 = vst.msk [vmem:[%s307] sm:$0x1] %vm298, 0.0
        %309 = vst.msk [vmem:[%s307 + $0x11] sm:$0x1] %vm298, 0.0
        %s310 = scalar_lea.vmem [#allocation2], 96
        %311 = vst.msk [vmem:[%s310] sm:$0x1] %vm298, 0.0
        %312 = vst.msk [vmem:[%s310 + $0x11] sm:$0x1] %vm298, 0.0
        %s313 = scalar_lea.vmem [#allocation2], 120
        %314 = vst.msk [vmem:[%s313] sm:$0x1] %vm298, 0.0
        %315 = vst.msk [vmem:[%s313 + $0x11] sm:$0x1] %vm298, 0.0
        %s316 = scalar_lea.vmem [#allocation2], 144
        %317 = vst.msk [vmem:[%s316] sm:$0x1] %vm298, 0.0
        %318 = vst.msk [vmem:[%s316 + $0x11] sm:$0x1] %vm298, 0.0
        %s319 = scalar_lea.vmem [#allocation2], 168
        %320 = vst.msk [vmem:[%s319] sm:$0x1] %vm298, 0.0
        %321 = vst.msk [vmem:[%s319 + $0x11] sm:$0x1] %vm298, 0.0
        %s322 = scalar_lea.vmem [#allocation2], 192
        %323 = vst.msk [vmem:[%s322] sm:$0x1] %vm298, 0.0
        %324 = vst.msk [vmem:[%s322 + $0x11] sm:$0x1] %vm298, 0.0
        %v325 = vld [vmem:[%s190] sm:$0xff]
        %v326 = vld [vmem:[%s190 + $0x8] sm:$0xff]
        %329 = vrot.lane.b32.xlu0 %v325, 1
        %v330 = vpop.permute.xlu0 %329
        %331 = vrot.lane.b32.xlu0 %v326, 1
        %v332 = vpop.permute.xlu0 %331
        %vm335 = vcmask 7168
        %v336 = vsel %vm335, 0.0, %v330
        %v337 = vsel %vm335, 0.0, %v332
        %338 = vrot.lane.b32.xlu0 %v325, 127
        %v339 = vpop.permute.xlu0 %338
        %340 = vrot.lane.b32.xlu0 %v326, 127
        %v341 = vpop.permute.xlu0 %340
        %vm344 = vcmask 121856
        %v345 = vsel %vm344, %v339, 0.0
        %v346 = vsel %vm344, %v341, 0.0
        %vm347 = vcmask 130048
        %348 = vst.msk [vmem:[#allocation2 + $0x1] sm:$0xff] %vm347, %v336
        %349 = vst.msk [vmem:[#allocation2 + $0x9] sm:$0xff] %vm347, %v337
        %350 = vst.msk [vmem:[%s301 + $0x1] sm:$0xff] %vm347, %v325
        %351 = vst.msk [vmem:[%s301 + $0x9] sm:$0xff] %vm347, %v326
        %352 = vst.msk [vmem:[%s304 + $0x1] sm:$0xff] %vm347, %v345
        %353 = vst.msk [vmem:[%s304 + $0x9] sm:$0xff] %vm347, %v346
        %s354 = scalar_lea.vmem %s190, 16 [#allocation9]
        %v355 = vld [vmem:[%s354] sm:$0xff]
        %v356 = vld [vmem:[%s354 + $0x8] sm:$0xff]
        %359 = vrot.lane.b32.xlu0 %v355, 1
        %v360 = vpop.permute.xlu0 %359
        %361 = vrot.lane.b32.xlu0 %v356, 1
        %v362 = vpop.permute.xlu0 %361
        %v365 = vsel %vm335, 0.0, %v360
        %v366 = vsel %vm335, 0.0, %v362
        %367 = vrot.lane.b32.xlu0 %v355, 127
        %v368 = vpop.permute.xlu0 %367
        %369 = vrot.lane.b32.xlu0 %v356, 127
        %v370 = vpop.permute.xlu0 %369
        %v373 = vsel %vm344, %v368, 0.0
        %v374 = vsel %vm344, %v370, 0.0
        %375 = vst.msk [vmem:[%s307 + $0x1] sm:$0xff] %vm347, %v365
        %376 = vst.msk [vmem:[%s307 + $0x9] sm:$0xff] %vm347, %v366
        %377 = vst.msk [vmem:[%s310 + $0x1] sm:$0xff] %vm347, %v355
        %378 = vst.msk [vmem:[%s310 + $0x9] sm:$0xff] %vm347, %v356
        %379 = vst.msk [vmem:[%s313 + $0x1] sm:$0xff] %vm347, %v373
        %380 = vst.msk [vmem:[%s313 + $0x9] sm:$0xff] %vm347, %v374
        %s381 = scalar_lea.vmem %s190, 32 [#allocation9]
        %v382 = vld [vmem:[%s381] sm:$0xff]
        %v383 = vld [vmem:[%s381 + $0x8] sm:$0xff]
        %386 = vrot.lane.b32.xlu0 %v382, 1
        %v387 = vpop.permute.xlu0 %386
        %388 = vrot.lane.b32.xlu0 %v383, 1
        %v389 = vpop.permute.xlu0 %388
        %v392 = vsel %vm335, 0.0, %v387
        %v393 = vsel %vm335, 0.0, %v389
        %394 = vrot.lane.b32.xlu0 %v382, 127
        %v395 = vpop.permute.xlu0 %394
        %396 = vrot.lane.b32.xlu0 %v383, 127
        %v397 = vpop.permute.xlu0 %396
        %v400 = vsel %vm344, %v395, 0.0
        %v401 = vsel %vm344, %v397, 0.0
        %402 = vst.msk [vmem:[%s316 + $0x1] sm:$0xff] %vm347, %v392
        %403 = vst.msk [vmem:[%s316 + $0x9] sm:$0xff] %vm347, %v393
        %404 = vst.msk [vmem:[%s319 + $0x1] sm:$0xff] %vm347, %v382
        %405 = vst.msk [vmem:[%s319 + $0x9] sm:$0xff] %vm347, %v383
        %406 = vst.msk [vmem:[%s322 + $0x1] sm:$0xff] %vm347, %v400
        %407 = vst.msk [vmem:[%s322 + $0x9] sm:$0xff] %vm347, %v401
        %v408 = vstv %s295
        %v409 = vstv %s296
        %v410 = vstv %s297
        %v411 = vld [vmem:[#allocation2] sm:$0xff]
        %v412 = vld [vmem:[#allocation2 + $0x8] sm:$0xff]
        %v413 = vstv %s214
        %v414 = vmul.f32 %v413, %v411
        %v415 = vmul.f32 %v413, %v412
        %v416 = vadd.f32 %v408, %v414
        %v417 = vadd.f32 %v408, %v415
        %v418 = vstv %s241
        %v419 = vmul.f32 %v418, %v411
        %v420 = vmul.f32 %v418, %v412
        %v421 = vadd.f32 %v409, %v419
        %v422 = vadd.f32 %v409, %v420
        %v423 = vstv %s268
        %v424 = vmul.f32 %v423, %v411
        %v425 = vmul.f32 %v423, %v412
        %v426 = vadd.f32 %v410, %v424
        %v427 = vadd.f32 %v410, %v425
        %v428 = vld [vmem:[#allocation2 + $0x1] sm:$0xff]
        %v429 = vld [vmem:[#allocation2 + $0x9] sm:$0xff]
        %v430 = vstv %s217
        %v431 = vmul.f32 %v430, %v428
        %v432 = vmul.f32 %v430, %v429
        %v433 = vadd.f32 %v416, %v431
        %v434 = vadd.f32 %v417, %v432
        %v435 = vstv %s244
        %v436 = vmul.f32 %v435, %v428
        %v437 = vmul.f32 %v435, %v429
        %v438 = vadd.f32 %v421, %v436
        %v439 = vadd.f32 %v422, %v437
        %v440 = vstv %s271
        %v441 = vmul.f32 %v440, %v428
        %v442 = vmul.f32 %v440, %v429
        %v443 = vadd.f32 %v426, %v441
        %v444 = vadd.f32 %v427, %v442
        %v445 = vld [vmem:[#allocation2 + $0x2] sm:$0xff]
        %v446 = vld [vmem:[#allocation2 + $0xa] sm:$0xff]
        %v447 = vstv %s220
        %v448 = vmul.f32 %v447, %v445
        %v449 = vmul.f32 %v447, %v446
        %v450 = vadd.f32 %v433, %v448
        %v451 = vadd.f32 %v434, %v449
        %v452 = vstv %s247
        %v453 = vmul.f32 %v452, %v445
        %v454 = vmul.f32 %v452, %v446
        %v455 = vadd.f32 %v438, %v453
        %v456 = vadd.f32 %v439, %v454
        %v457 = vstv %s274
        %v458 = vmul.f32 %v457, %v445
        %v459 = vmul.f32 %v457, %v446
        %v460 = vadd.f32 %v443, %v458
        %v461 = vadd.f32 %v444, %v459
        %v462 = vld [vmem:[%s301] sm:$0xff]
        %v463 = vld [vmem:[%s301 + $0x8] sm:$0xff]
        %v464 = vstv %s215
        %v465 = vmul.f32 %v464, %v462
        %v466 = vmul.f32 %v464, %v463
        %v467 = vadd.f32 %v450, %v465
        %v468 = vadd.f32 %v451, %v466
        %v469 = vstv %s242
        %v470 = vmul.f32 %v469, %v462
        %v471 = vmul.f32 %v469, %v463
        %v472 = vadd.f32 %v455, %v470
        %v473 = vadd.f32 %v456, %v471
        %v474 = vstv %s269
        %v475 = vmul.f32 %v474, %v462
        %v476 = vmul.f32 %v474, %v463
        %v477 = vadd.f32 %v460, %v475
        %v478 = vadd.f32 %v461, %v476
        %v479 = vld [vmem:[%s301 + $0x1] sm:$0xff]
        %v480 = vld [vmem:[%s301 + $0x9] sm:$0xff]
        %v481 = vstv %s218
        %v482 = vmul.f32 %v481, %v479
        %v483 = vmul.f32 %v481, %v480
        %v484 = vadd.f32 %v467, %v482
        %v485 = vadd.f32 %v468, %v483
        %v486 = vstv %s245
        %v487 = vmul.f32 %v486, %v479
        %v488 = vmul.f32 %v486, %v480
        %v489 = vadd.f32 %v472, %v487
        %v490 = vadd.f32 %v473, %v488
        %v491 = vstv %s272
        %v492 = vmul.f32 %v491, %v479
        %v493 = vmul.f32 %v491, %v480
        %v494 = vadd.f32 %v477, %v492
        %v495 = vadd.f32 %v478, %v493
        %v496 = vld [vmem:[%s301 + $0x2] sm:$0xff]
        %v497 = vld [vmem:[%s301 + $0xa] sm:$0xff]
        %v498 = vstv %s221
        %v499 = vmul.f32 %v498, %v496
        %v500 = vmul.f32 %v498, %v497
        %v501 = vadd.f32 %v484, %v499
        %v502 = vadd.f32 %v485, %v500
        %v503 = vstv %s248
        %v504 = vmul.f32 %v503, %v496
        %v505 = vmul.f32 %v503, %v497
        %v506 = vadd.f32 %v489, %v504
        %v507 = vadd.f32 %v490, %v505
        %v508 = vstv %s275
        %v509 = vmul.f32 %v508, %v496
        %v510 = vmul.f32 %v508, %v497
        %v511 = vadd.f32 %v494, %v509
        %v512 = vadd.f32 %v495, %v510
        %v513 = vld [vmem:[%s304] sm:$0xff]
        %v514 = vld [vmem:[%s304 + $0x8] sm:$0xff]
        %v515 = vstv %s216
        %v516 = vmul.f32 %v515, %v513
        %v517 = vmul.f32 %v515, %v514
        %v518 = vadd.f32 %v501, %v516
        %v519 = vadd.f32 %v502, %v517
        %v520 = vstv %s243
        %v521 = vmul.f32 %v520, %v513
        %v522 = vmul.f32 %v520, %v514
        %v523 = vadd.f32 %v506, %v521
        %v524 = vadd.f32 %v507, %v522
        %v525 = vstv %s270
        %v526 = vmul.f32 %v525, %v513
        %v527 = vmul.f32 %v525, %v514
        %v528 = vadd.f32 %v511, %v526
        %v529 = vadd.f32 %v512, %v527
        %v530 = vld [vmem:[%s304 + $0x1] sm:$0xff]
        %v531 = vld [vmem:[%s304 + $0x9] sm:$0xff]
        %v532 = vstv %s219
        %v533 = vmul.f32 %v532, %v530
        %v534 = vmul.f32 %v532, %v531
        %v535 = vadd.f32 %v518, %v533
        %v536 = vadd.f32 %v519, %v534
        %v537 = vstv %s246
        %v538 = vmul.f32 %v537, %v530
        %v539 = vmul.f32 %v537, %v531
        %v540 = vadd.f32 %v523, %v538
        %v541 = vadd.f32 %v524, %v539
        %v542 = vstv %s273
        %v543 = vmul.f32 %v542, %v530
        %v544 = vmul.f32 %v542, %v531
        %v545 = vadd.f32 %v528, %v543
        %v546 = vadd.f32 %v529, %v544
        %v547 = vld [vmem:[%s304 + $0x2] sm:$0xff]
        %v548 = vld [vmem:[%s304 + $0xa] sm:$0xff]
        %v549 = vstv %s222
        %v550 = vmul.f32 %v549, %v547
        %v551 = vmul.f32 %v549, %v548
        %v552 = vadd.f32 %v535, %v550
        %v553 = vadd.f32 %v536, %v551
        %v554 = vstv %s249
        %v555 = vmul.f32 %v554, %v547
        %v556 = vmul.f32 %v554, %v548
        %v557 = vadd.f32 %v540, %v555
        %v558 = vadd.f32 %v541, %v556
        %v559 = vstv %s276
        %v560 = vmul.f32 %v559, %v547
        %v561 = vmul.f32 %v559, %v548
        %v562 = vadd.f32 %v545, %v560
        %v563 = vadd.f32 %v546, %v561
        %v564 = vld [vmem:[%s307] sm:$0xff]
        %v565 = vld [vmem:[%s307 + $0x8] sm:$0xff]
        %v566 = vstv %s223
        %v567 = vmul.f32 %v566, %v564
        %v568 = vmul.f32 %v566, %v565
        %v569 = vadd.f32 %v552, %v567
        %v570 = vadd.f32 %v553, %v568
        %v571 = vstv %s250
        %v572 = vmul.f32 %v571, %v564
        %v573 = vmul.f32 %v571, %v565
        %v574 = vadd.f32 %v557, %v572
        %v575 = vadd.f32 %v558, %v573
        %v576 = vstv %s277
        %v577 = vmul.f32 %v576, %v564
        %v578 = vmul.f32 %v576, %v565
        %v579 = vadd.f32 %v562, %v577
        %v580 = vadd.f32 %v563, %v578
        %v581 = vld [vmem:[%s307 + $0x1] sm:$0xff]
        %v582 = vld [vmem:[%s307 + $0x9] sm:$0xff]
        %v583 = vstv %s226
        %v584 = vmul.f32 %v583, %v581
        %v585 = vmul.f32 %v583, %v582
        %v586 = vadd.f32 %v569, %v584
        %v587 = vadd.f32 %v570, %v585
        %v588 = vstv %s253
        %v589 = vmul.f32 %v588, %v581
        %v590 = vmul.f32 %v588, %v582
        %v591 = vadd.f32 %v574, %v589
        %v592 = vadd.f32 %v575, %v590
        %v593 = vstv %s280
        %v594 = vmul.f32 %v593, %v581
        %v595 = vmul.f32 %v593, %v582
        %v596 = vadd.f32 %v579, %v594
        %v597 = vadd.f32 %v580, %v595
        %v598 = vld [vmem:[%s307 + $0x2] sm:$0xff]
        %v599 = vld [vmem:[%s307 + $0xa] sm:$0xff]
        %v600 = vstv %s229
        %v601 = vmul.f32 %v600, %v598
        %v602 = vmul.f32 %v600, %v599
        %v603 = vadd.f32 %v586, %v601
        %v604 = vadd.f32 %v587, %v602
        %v605 = vstv %s256
        %v606 = vmul.f32 %v605, %v598
        %v607 = vmul.f32 %v605, %v599
        %v608 = vadd.f32 %v591, %v606
        %v609 = vadd.f32 %v592, %v607
        %v610 = vstv %s283
        %v611 = vmul.f32 %v610, %v598
        %v612 = vmul.f32 %v610, %v599
        %v613 = vadd.f32 %v596, %v611
        %v614 = vadd.f32 %v597, %v612
        %v615 = vld [vmem:[%s310] sm:$0xff]
        %v616 = vld [vmem:[%s310 + $0x8] sm:$0xff]
        %v617 = vstv %s224
        %v618 = vmul.f32 %v617, %v615
        %v619 = vmul.f32 %v617, %v616
        %v620 = vadd.f32 %v603, %v618
        %v621 = vadd.f32 %v604, %v619
        %v622 = vstv %s251
        %v623 = vmul.f32 %v622, %v615
        %v624 = vmul.f32 %v622, %v616
        %v625 = vadd.f32 %v608, %v623
        %v626 = vadd.f32 %v609, %v624
        %v627 = vstv %s278
        %v628 = vmul.f32 %v627, %v615
        %v629 = vmul.f32 %v627, %v616
        %v630 = vadd.f32 %v613, %v628
        %v631 = vadd.f32 %v614, %v629
        %v632 = vld [vmem:[%s310 + $0x1] sm:$0xff]
        %v633 = vld [vmem:[%s310 + $0x9] sm:$0xff]
        %v634 = vstv %s227
        %v635 = vmul.f32 %v634, %v632
        %v636 = vmul.f32 %v634, %v633
        %v637 = vadd.f32 %v620, %v635
        %v638 = vadd.f32 %v621, %v636
        %v639 = vstv %s254
        %v640 = vmul.f32 %v639, %v632
        %v641 = vmul.f32 %v639, %v633
        %v642 = vadd.f32 %v625, %v640
        %v643 = vadd.f32 %v626, %v641
        %v644 = vstv %s281
        %v645 = vmul.f32 %v644, %v632
        %v646 = vmul.f32 %v644, %v633
        %v647 = vadd.f32 %v630, %v645
        %v648 = vadd.f32 %v631, %v646
        %v649 = vld [vmem:[%s310 + $0x2] sm:$0xff]
        %v650 = vld [vmem:[%s310 + $0xa] sm:$0xff]
        %v651 = vstv %s230
        %v652 = vmul.f32 %v651, %v649
        %v653 = vmul.f32 %v651, %v650
        %v654 = vadd.f32 %v637, %v652
        %v655 = vadd.f32 %v638, %v653
        %v656 = vstv %s257
        %v657 = vmul.f32 %v656, %v649
        %v658 = vmul.f32 %v656, %v650
        %v659 = vadd.f32 %v642, %v657
        %v660 = vadd.f32 %v643, %v658
        %v661 = vstv %s284
        %v662 = vmul.f32 %v661, %v649
        %v663 = vmul.f32 %v661, %v650
        %v664 = vadd.f32 %v647, %v662
        %v665 = vadd.f32 %v648, %v663
        %v666 = vld [vmem:[%s313] sm:$0xff]
        %v667 = vld [vmem:[%s313 + $0x8] sm:$0xff]
        %v668 = vstv %s225
        %v669 = vmul.f32 %v668, %v666
        %v670 = vmul.f32 %v668, %v667
        %v671 = vadd.f32 %v654, %v669
        %v672 = vadd.f32 %v655, %v670
        %v673 = vstv %s252
        %v674 = vmul.f32 %v673, %v666
        %v675 = vmul.f32 %v673, %v667
        %v676 = vadd.f32 %v659, %v674
        %v677 = vadd.f32 %v660, %v675
        %v678 = vstv %s279
        %v679 = vmul.f32 %v678, %v666
        %v680 = vmul.f32 %v678, %v667
        %v681 = vadd.f32 %v664, %v679
        %v682 = vadd.f32 %v665, %v680
        %v683 = vld [vmem:[%s313 + $0x1] sm:$0xff]
        %v684 = vld [vmem:[%s313 + $0x9] sm:$0xff]
        %v685 = vstv %s228
        %v686 = vmul.f32 %v685, %v683
        %v687 = vmul.f32 %v685, %v684
        %v688 = vadd.f32 %v671, %v686
        %v689 = vadd.f32 %v672, %v687
        %v690 = vstv %s255
        %v691 = vmul.f32 %v690, %v683
        %v692 = vmul.f32 %v690, %v684
        %v693 = vadd.f32 %v676, %v691
        %v694 = vadd.f32 %v677, %v692
        %v695 = vstv %s282
        %v696 = vmul.f32 %v695, %v683
        %v697 = vmul.f32 %v695, %v684
        %v698 = vadd.f32 %v681, %v696
        %v699 = vadd.f32 %v682, %v697
        %v700 = vld [vmem:[%s313 + $0x2] sm:$0xff]
        %v701 = vld [vmem:[%s313 + $0xa] sm:$0xff]
        %v702 = vstv %s231
        %v703 = vmul.f32 %v702, %v700
        %v704 = vmul.f32 %v702, %v701
        %v705 = vadd.f32 %v688, %v703
        %v706 = vadd.f32 %v689, %v704
        %v707 = vstv %s258
        %v708 = vmul.f32 %v707, %v700
        %v709 = vmul.f32 %v707, %v701
        %v710 = vadd.f32 %v693, %v708
        %v711 = vadd.f32 %v694, %v709
        %v712 = vstv %s285
        %v713 = vmul.f32 %v712, %v700
        %v714 = vmul.f32 %v712, %v701
        %v715 = vadd.f32 %v698, %v713
        %v716 = vadd.f32 %v699, %v714
        %v717 = vld [vmem:[%s316] sm:$0xff]
        %v718 = vld [vmem:[%s316 + $0x8] sm:$0xff]
        %v719 = vstv %s232
        %v720 = vmul.f32 %v719, %v717
        %v721 = vmul.f32 %v719, %v718
        %v722 = vadd.f32 %v705, %v720
        %v723 = vadd.f32 %v706, %v721
        %v724 = vstv %s259
        %v725 = vmul.f32 %v724, %v717
        %v726 = vmul.f32 %v724, %v718
        %v727 = vadd.f32 %v710, %v725
        %v728 = vadd.f32 %v711, %v726
        %v729 = vstv %s286
        %v730 = vmul.f32 %v729, %v717
        %v731 = vmul.f32 %v729, %v718
        %v732 = vadd.f32 %v715, %v730
        %v733 = vadd.f32 %v716, %v731
        %v734 = vld [vmem:[%s316 + $0x1] sm:$0xff]
        %v735 = vld [vmem:[%s316 + $0x9] sm:$0xff]
        %v736 = vstv %s235
        %v737 = vmul.f32 %v736, %v734
        %v738 = vmul.f32 %v736, %v735
        %v739 = vadd.f32 %v722, %v737
        %v740 = vadd.f32 %v723, %v738
        %v741 = vstv %s262
        %v742 = vmul.f32 %v741, %v734
        %v743 = vmul.f32 %v741, %v735
        %v744 = vadd.f32 %v727, %v742
        %v745 = vadd.f32 %v728, %v743
        %v746 = vstv %s289
        %v747 = vmul.f32 %v746, %v734
        %v748 = vmul.f32 %v746, %v735
        %v749 = vadd.f32 %v732, %v747
        %v750 = vadd.f32 %v733, %v748
        %v751 = vld [vmem:[%s316 + $0x2] sm:$0xff]
        %v752 = vld [vmem:[%s316 + $0xa] sm:$0xff]
        %v753 = vstv %s238
        %v754 = vmul.f32 %v753, %v751
        %v755 = vmul.f32 %v753, %v752
        %v756 = vadd.f32 %v739, %v754
        %v757 = vadd.f32 %v740, %v755
        %v758 = vstv %s265
        %v759 = vmul.f32 %v758, %v751
        %v760 = vmul.f32 %v758, %v752
        %v761 = vadd.f32 %v744, %v759
        %v762 = vadd.f32 %v745, %v760
        %v763 = vstv %s292
        %v764 = vmul.f32 %v763, %v751
        %v765 = vmul.f32 %v763, %v752
        %v766 = vadd.f32 %v749, %v764
        %v767 = vadd.f32 %v750, %v765
        %v768 = vld [vmem:[%s319] sm:$0xff]
        %v769 = vld [vmem:[%s319 + $0x8] sm:$0xff]
        %v770 = vstv %s233
        %v771 = vmul.f32 %v770, %v768
        %v772 = vmul.f32 %v770, %v769
        %v773 = vadd.f32 %v756, %v771
        %v774 = vadd.f32 %v757, %v772
        %v775 = vstv %s260
        %v776 = vmul.f32 %v775, %v768
        %v777 = vmul.f32 %v775, %v769
        %v778 = vadd.f32 %v761, %v776
        %v779 = vadd.f32 %v762, %v777
        %v780 = vstv %s287
        %v781 = vmul.f32 %v780, %v768
        %v782 = vmul.f32 %v780, %v769
        %v783 = vadd.f32 %v766, %v781
        %v784 = vadd.f32 %v767, %v782
        %v785 = vld [vmem:[%s319 + $0x1] sm:$0xff]
        %v786 = vld [vmem:[%s319 + $0x9] sm:$0xff]
        %v787 = vstv %s236
        %v788 = vmul.f32 %v787, %v785
        %v789 = vmul.f32 %v787, %v786
        %v790 = vadd.f32 %v773, %v788
        %v791 = vadd.f32 %v774, %v789
        %v792 = vstv %s263
        %v793 = vmul.f32 %v792, %v785
        %v794 = vmul.f32 %v792, %v786
        %v795 = vadd.f32 %v778, %v793
        %v796 = vadd.f32 %v779, %v794
        %v797 = vstv %s290
        %v798 = vmul.f32 %v797, %v785
        %v799 = vmul.f32 %v797, %v786
        %v800 = vadd.f32 %v783, %v798
        %v801 = vadd.f32 %v784, %v799
        %v802 = vld [vmem:[%s319 + $0x2] sm:$0xff]
        %v803 = vld [vmem:[%s319 + $0xa] sm:$0xff]
        %v804 = vstv %s239
        %v805 = vmul.f32 %v804, %v802
        %v806 = vmul.f32 %v804, %v803
        %v807 = vadd.f32 %v790, %v805
        %v808 = vadd.f32 %v791, %v806
        %v809 = vstv %s266
        %v810 = vmul.f32 %v809, %v802
        %v811 = vmul.f32 %v809, %v803
        %v812 = vadd.f32 %v795, %v810
        %v813 = vadd.f32 %v796, %v811
        %v814 = vstv %s293
        %v815 = vmul.f32 %v814, %v802
        %v816 = vmul.f32 %v814, %v803
        %v817 = vadd.f32 %v800, %v815
        %v818 = vadd.f32 %v801, %v816
        %v819 = vld [vmem:[%s322] sm:$0xff]
        %v820 = vld [vmem:[%s322 + $0x8] sm:$0xff]
        %v821 = vstv %s234
        %v822 = vmul.f32 %v821, %v819
        %v823 = vmul.f32 %v821, %v820
        %v824 = vadd.f32 %v807, %v822
        %v825 = vadd.f32 %v808, %v823
        %v826 = vstv %s261
        %v827 = vmul.f32 %v826, %v819
        %v828 = vmul.f32 %v826, %v820
        %v829 = vadd.f32 %v812, %v827
        %v830 = vadd.f32 %v813, %v828
        %v831 = vstv %s288
        %v832 = vmul.f32 %v831, %v819
        %v833 = vmul.f32 %v831, %v820
        %v834 = vadd.f32 %v817, %v832
        %v835 = vadd.f32 %v818, %v833
        %v836 = vld [vmem:[%s322 + $0x1] sm:$0xff]
        %v837 = vld [vmem:[%s322 + $0x9] sm:$0xff]
        %v838 = vstv %s237
        %v839 = vmul.f32 %v838, %v836
        %v840 = vmul.f32 %v838, %v837
        %v841 = vadd.f32 %v824, %v839
        %v842 = vadd.f32 %v825, %v840
        %v843 = vstv %s264
        %v844 = vmul.f32 %v843, %v836
        %v845 = vmul.f32 %v843, %v837
        %v846 = vadd.f32 %v829, %v844
        %v847 = vadd.f32 %v830, %v845
        %v848 = vstv %s291
        %v849 = vmul.f32 %v848, %v836
        %v850 = vmul.f32 %v848, %v837
        %v851 = vadd.f32 %v834, %v849
        %v852 = vadd.f32 %v835, %v850
        %v853 = vld [vmem:[%s322 + $0x2] sm:$0xff]
        %v854 = vld [vmem:[%s322 + $0xa] sm:$0xff]
        %v855 = vstv %s240
        %v856 = vmul.f32 %v855, %v853
        %v857 = vmul.f32 %v855, %v854
        %v858 = vadd.f32 %v841, %v856
        %v859 = vadd.f32 %v842, %v857
        %v860 = vstv %s267
        %v861 = vmul.f32 %v860, %v853
        %v862 = vmul.f32 %v860, %v854
        %v863 = vadd.f32 %v846, %v861
        %v864 = vadd.f32 %v847, %v862
        %v865 = vstv %s294
        %v866 = vmul.f32 %v865, %v853
        %v867 = vmul.f32 %v865, %v854
        %v868 = vadd.f32 %v851, %v866
        %v869 = vadd.f32 %v852, %v867
        %870 = vst.msk [vmem:[%s213] sm:$0xff] %vm347, %v858
        %871 = vst.msk [vmem:[%s213 + $0x8] sm:$0xff] %vm347, %v859
        %s872 = scalar_lea.vmem %s213, 16 [#allocation10]
        %873 = vst.msk [vmem:[%s872] sm:$0xff] %vm347, %v863
        %874 = vst.msk [vmem:[%s872 + $0x8] sm:$0xff] %vm347, %v864
        %s875 = scalar_lea.vmem %s213, 32 [#allocation10]
        %876 = vst.msk [vmem:[%s875] sm:$0xff] %vm347, %v868
        %877 = vst.msk [vmem:[%s875 + $0x8] sm:$0xff] %vm347, %v869
        %s878 = sand.u32 %s98, 1
        %s879 = scalar_lea.sflag [#allocation5], %s878
        %s880 = sand.u32 %s98, 1
        %s881 = smul.addr %s880, 48
        %s882 = scalar_lea.vmem [#allocation10], %s881
        // Predicated region
        $region45: #{tpu_custom_call.1} parent=31 // pred_check
          %p883 = pneg %p108
        $region46: #{tpu_custom_call.1} parent=31 // pred_check_branch
          %885 = sbr.rel (%p883) target = $region48
        $region47: #{tpu_custom_call.1} parent=31 // pred_region
          %s887 = ssub.s32 768, 768
          %888 = vsyncadd %s879, %s887
          %s889 = smul.addr %s22, 6
          %s890 = smul.addr %s889, 128
          %s891 = scalar_lea.hbm %s3, %s890
          %s892 = sshll.u32 %s882, 4
          %s893 = int_to_ptr.vmem [resolvable:$true] %s892
          %898 = dma.vmem_to_hbm [thread:$0]  %s893, 768, %s891, %s879, 128, 128, 8
        $region48: #{tpu_custom_call.1} parent=31 // pred_fallthru
          _
      $region32: #{tpu_custom_call.1} parent=5 // pred_fallthru
        _
      %p899 = scmp.le.s32.totalorder 2, %s17
      // Predicated region
      $region49: #{tpu_custom_call.1} parent=5 // pred_check
        %p900 = pneg %p899
      $region50: #{tpu_custom_call.1} parent=5 // pred_check_branch
        %902 = sbr.rel (%p900) target = $region52
      $region51: #{tpu_custom_call.1} parent=5 // pred_region
        %s903 = ssub.s32 %s17, 2
        // Predicated region
        $region53: #{tpu_custom_call.1} parent=51 // pred_check
          %p904 = pneg %p114
        $region54: #{tpu_custom_call.1} parent=51 // pred_check_branch
          %906 = sbr.rel (%p904) target = $region56
        $region55: #{tpu_custom_call.1} parent=51 // pred_region
          %s907 = sand.u32 %s99, 1
          %s908 = scalar_lea.sflag [#allocation5], %s907
          %s909 = sand.u32 %s99, 1
          %s910 = smul.addr %s909, 48
          %s911 = scalar_lea.vmem [#allocation10], %s910
          %912 = dma.done %s908, 768
        $region56: #{tpu_custom_call.1} parent=51 // pred_fallthru
          _
      $region52: #{tpu_custom_call.1} parent=5 // pred_fallthru
        _
    $region6: #{tpu_custom_call.1} parent=1 // loop_footer
      %s21 = sadd.s32 1, %s17
    $region7: #{tpu_custom_call.1} parent=1 // loop_footer_branch
      %16 = sbr.rel target = $region3
    $region8: #{tpu_custom_call.1} parent=1 // loop_exit
      _
    %913 = vsyncpa [#allocation4], 1
    %s914 = scalar_lea.sflag [#allocation4], 1
    %915 = vsyncpa %s914, 1
    %916 = vsyncpa [#allocation5], 1
    %s917 = scalar_lea.sflag [#allocation5], 1
    %918 = vsyncpa %s917, 1
    %919 = vsyncpa [#allocation6], 1
    %s920 = scalar_lea.sflag [#allocation6], 1
    %921 = vsyncpa %s920, 1
    %922 = vsyncpa [#allocation7], 1
    %s923 = scalar_lea.sflag [#allocation7], 1
    %924 = vsyncpa %s923, 1

</llo_original>
